<compile_context>
chip_gen: v7x
topology: tpu7x:2x2x1
jax: 0.10.0
libtpu: 0.0.40
codegen_flags: <defaults>
</compile_context>

<pallas_src>
import jax
import jax.numpy as jnp
from jax.experimental import pallas as pl
from jax.experimental.pallas import tpu as pltpu


# --------------------------- chip-derived config ----------------------------

def _vmem_limit_bytes():
    try:
        cap = pltpu.get_tpu_info().vmem_capacity_bytes
    except Exception:
        cap = 64 * 1024 * 1024          # conservative fallback (fits v7x too)
    return int(cap * 3 // 4)            # ~25% headroom for compiler scratch


def _detect_v5e():
    try:
        kind = jax.devices()[0].device_kind.lower()
        return ("v5 lite" in kind) or ("v5e" in kind) or ("v5litepod" in kind)
    except Exception:
        return False


_VMEM_LIMIT = _vmem_limit_bytes()
_IS_V5E = _detect_v5e()


def _spatial_tile(hw, bytes_per_lane, vmem_budget, lane_cap=32768):
    """Largest lane-dense (multiple of 128) divisor of hw within the budget."""
    if hw < 128 or hw % 128 != 0:
        return hw                       # small/odd images: one block per image
    cap = min(hw, lane_cap, max(128, vmem_budget // max(bytes_per_lane, 1)))
    ts = (cap // 128) * 128
    while ts > 128 and hw % ts != 0:
        ts -= 128
    return ts


# ---------------------------------------------------------------------------
# Kernel A: BN1 partial statistics (one fused pass over x).
#   x block   : (1, C, ts)       channel-major, spatial on lanes
#   stat block: (1, 1, 2*C, 1)   [sum; sum-of-squares] per channel, per tile
# ---------------------------------------------------------------------------
def _bn1_stats_kernel(x_ref, stat_ref):
    x = x_ref[0].astype(jnp.float32)                        # (C, ts)
    ssum = jnp.sum(x, axis=1, keepdims=True)                # (C, 1)
    ssq = jnp.sum(x * x, axis=1, keepdims=True)             # (C, 1)
    stat_ref[0, 0] = jnp.concatenate([ssum, ssq], axis=0)   # (2C, 1)


# ---------------------------------------------------------------------------
# Kernel B: BN1 + ReLU + 1x1 conv -> BN2 partial statistics only.
# No y1 is written to HBM; the final kernel recomputes it (cheap matmul).
# ---------------------------------------------------------------------------
def _make_bn2_stats_kernel(use_vpu_fma, mxu_dtype):
    def kernel(x_ref, s1_ref, t1_ref, w1_ref, b1_ref, stat_ref):
        x = x_ref[0].astype(jnp.float32)                         # (C, ts)
        h1 = jnp.maximum(x * s1_ref[...] + t1_ref[...], 0.0)     # BN1 + ReLU
        ic = w1_ref.shape[0]
        ts = x.shape[1]
        if use_vpu_fma:
            # tiny contraction on v5e: VPU broadcast-FMA instead of the MXU.
            y1 = jnp.broadcast_to(b1_ref[...], (ic, ts))
            for ci in range(x.shape[0]):
                y1 = y1 + w1_ref[:, ci:ci + 1] * h1[ci:ci + 1, :]
        else:
            y1 = jnp.dot(w1_ref[...].astype(mxu_dtype), h1.astype(mxu_dtype),
                         preferred_element_type=jnp.float32) + b1_ref[...]
        ssum = jnp.sum(y1, axis=1, keepdims=True)                # (IC, 1)
        ssq = jnp.sum(y1 * y1, axis=1, keepdims=True)            # (IC, 1)
        stat_ref[0, 0] = jnp.concatenate([ssum, ssq], axis=0)    # (2*IC, 1)
    return kernel


# ---------------------------------------------------------------------------
# Kernel F: recompute BN1+ReLU+1x1 conv, apply BN2+ReLU, 3x3 conv (pad=1) as
# ONE deep-K matmul over 9 stacked lane-rolled taps, then fused concat.
#   coords (2, HW) int32 holds [row; col] indices for in-kernel halo masks.
# ---------------------------------------------------------------------------
def _make_final_kernel(img_h, img_w, use_vpu_fma, mxu_dtype):
    def kernel(x_ref, s1_ref, t1_ref, w1_ref, b1_ref,
               s2_ref, t2_ref, w2_ref, b2_ref, crd_ref, o_ref):
        x = x_ref[0].astype(jnp.float32)                         # (C, HW)
        h1 = jnp.maximum(x * s1_ref[...] + t1_ref[...], 0.0)     # BN1 + ReLU
        ic = w1_ref.shape[0]
        hw = x.shape[1]

        # recompute the 1x1 conv (cheaper than a y1 HBM write + read).
        if use_vpu_fma:
            y1 = jnp.broadcast_to(b1_ref[...], (ic, hw))
            for ci in range(x.shape[0]):
                y1 = y1 + w1_ref[:, ci:ci + 1] * h1[ci:ci + 1, :]
        else:
            y1 = jnp.dot(w1_ref[...].astype(mxu_dtype), h1.astype(mxu_dtype),
                         preferred_element_type=jnp.float32) + b1_ref[...]
        a = jnp.maximum(y1 * s2_ref[...] + t2_ref[...], 0.0)     # BN2 + ReLU

        crd = crd_ref[...]
        row = crd[0:1, :]                                        # (1, HW) int32
        col = crd[1:2, :]

        # Build the 9 halo-masked, lane-rolled taps and stack them along the
        # contraction axis -> one (9*IC, HW) operand for a single MXU matmul.
        taps = []
        for dh in (-1, 0, 1):
            for dw in (-1, 0, 1):
                off = dh * img_w + dw
                tap = a if off == 0 else pltpu.roll(a, (-off) % hw, axis=1)
                conds = []
                if dh == -1:
                    conds.append(row >= 1)
                elif dh == 1:
                    conds.append(row <= img_h - 2)
                if dw == -1:
                    conds.append(col >= 1)
                elif dw == 1:
                    conds.append(col <= img_w - 2)
                if conds:
                    ok = conds[0]
                    for cnd in conds[1:]:
                        ok = ok & cnd
                    tap = jnp.where(ok, tap, 0.0)
                taps.append(tap)
        stacked = jnp.concatenate(taps, axis=0)                  # (9*IC, HW)

        acc = jnp.dot(w2_ref[...].astype(mxu_dtype), stacked.astype(mxu_dtype),
                      preferred_element_type=jnp.float32) + b2_ref[...]

        # Fused concat: one aligned lane-dense store of the full (C+G, HW) slab.
        o_ref[0] = jnp.concatenate([x, acc], axis=0).astype(o_ref.dtype)
    return kernel


# ------------------------------ glue / forward ------------------------------

def bottleneck_forward(x_nchw, p, eps=1e-5, mxu_dtype=jnp.float32):
    """Forward pass of the Bottleneck block (training-mode BatchNorm)."""
    n, c, h, w = x_nchw.shape
    ic = p["w1"].shape[0]              # interChannels
    g = p["w2"].shape[0]               # growthRate
    hw = h * w
    # channel-major view: NCHW is already channel-major -> no transpose.
    x_r = x_nchw.reshape(n, c, hw).astype(jnp.float32)

    use_vpu_fma = (c <= 8) and _IS_V5E
    m_total = n * hw

    # spatial tile for the stats kernels, derived from the VMEM budget
    # (x block double-buffered + the y1 intermediate of kernel B).
    ts = _spatial_tile(hw, bytes_per_lane=(2 * c + ic) * 4,
                       vmem_budget=_VMEM_LIMIT // 2)
    nj = hw // ts

    cparams2d = pltpu.CompilerParams(
        dimension_semantics=("parallel", "parallel"),
        vmem_limit_bytes=_VMEM_LIMIT)

    # --- Kernel A: BN1 statistics (single fused pass over x) ---------------
    st1 = pl.pallas_call(
        _bn1_stats_kernel,
        out_shape=jax.ShapeDtypeStruct((n, nj, 2 * c, 1), jnp.float32),
        grid=(n, nj),
        in_specs=[pl.BlockSpec((1, c, ts), lambda i, j: (i, 0, j))],
        out_specs=pl.BlockSpec((1, 1, 2 * c, 1), lambda i, j: (i, j, 0, 0)),
        compiler_params=cparams2d,
    )(x_r)

    tot1 = jnp.sum(st1[..., 0], axis=(0, 1))                  # (2*C,)
    mean1 = tot1[:c] / m_total
    var1 = jnp.maximum(tot1[c:] / m_total - mean1 * mean1, 0.0)
    inv1 = p["gamma1"] / jnp.sqrt(var1 + eps)
    scale1 = inv1.reshape(c, 1).astype(jnp.float32)
    shift1 = (p["beta1"] - mean1 * inv1).reshape(c, 1).astype(jnp.float32)

    w1_mat = p["w1"].reshape(ic, c).astype(jnp.float32)        # 1x1 conv weight
    b1 = p["b1"].reshape(ic, 1).astype(jnp.float32)

    # --- Kernel B: BN1 + ReLU + 1x1 conv -> BN2 partial stats (no y1 write) -
    st2 = pl.pallas_call(
        _make_bn2_stats_kernel(use_vpu_fma, mxu_dtype),
        out_shape=jax.ShapeDtypeStruct((n, nj, 2 * ic, 1), jnp.float32),
        grid=(n, nj),
        in_specs=[pl.BlockSpec((1, c, ts), lambda i, j: (i, 0, j)),
                  pl.BlockSpec((c, 1), lambda i, j: (0, 0)),
                  pl.BlockSpec((c, 1), lambda i, j: (0, 0)),
                  pl.BlockSpec((ic, c), lambda i, j: (0, 0)),
                  pl.BlockSpec((ic, 1), lambda i, j: (0, 0))],
        out_specs=pl.BlockSpec((1, 1, 2 * ic, 1), lambda i, j: (i, j, 0, 0)),
        compiler_params=cparams2d,
    )(x_r, scale1, shift1, w1_mat, b1)

    tot2 = jnp.sum(st2[..., 0], axis=(0, 1))                  # (2*IC,)
    mean2 = tot2[:ic] / m_total
    var2 = jnp.maximum(tot2[ic:] / m_total - mean2 * mean2, 0.0)
    inv2 = p["gamma2"] / jnp.sqrt(var2 + eps)
    scale2 = inv2.reshape(ic, 1).astype(jnp.float32)
    shift2 = (p["beta2"] - mean2 * inv2).reshape(ic, 1).astype(jnp.float32)

    # conv2 weight flattened for ONE deep-K matmul: (G, 9*IC), k = kh*3 + kw.
    w2_flat = jnp.transpose(p["w2"], (0, 2, 3, 1)).reshape(g, 9 * ic) \
                 .astype(jnp.float32)
    b2 = p["b2"].reshape(g, 1).astype(jnp.float32)

    # row/col index operand for in-kernel halo masks (tiny, int32).
    ridx = jnp.broadcast_to(jnp.arange(h, dtype=jnp.int32)[:, None],
                            (h, w)).reshape(1, hw)
    cidx = jnp.broadcast_to(jnp.arange(w, dtype=jnp.int32)[None, :],
                            (h, w)).reshape(1, hw)
    coords = jnp.concatenate([ridx, cidx], axis=0)             # (2, HW)

    # --- Kernel F: recompute 1x1 + BN2 + ReLU + 3x3 conv + fused concat -----
    out = pl.pallas_call(
        _make_final_kernel(h, w, use_vpu_fma, mxu_dtype),
        out_shape=jax.ShapeDtypeStruct((n, c + g, hw), jnp.float32),
        grid=(n,),
        in_specs=[pl.BlockSpec((1, c, hw), lambda i: (i, 0, 0)),
                  pl.BlockSpec((c, 1), lambda i: (0, 0)),
                  pl.BlockSpec((c, 1), lambda i: (0, 0)),
                  pl.BlockSpec((ic, c), lambda i: (0, 0)),
                  pl.BlockSpec((ic, 1), lambda i: (0, 0)),
                  pl.BlockSpec((ic, 1), lambda i: (0, 0)),
                  pl.BlockSpec((ic, 1), lambda i: (0, 0)),
                  pl.BlockSpec((g, 9 * ic), lambda i: (0, 0)),
                  pl.BlockSpec((g, 1), lambda i: (0, 0)),
                  pl.BlockSpec((2, hw), lambda i: (0, 0))],
        out_specs=pl.BlockSpec((1, c + g, hw), lambda i: (i, 0, 0)),
        compiler_params=pltpu.CompilerParams(
            dimension_semantics=("parallel",),
            vmem_limit_bytes=_VMEM_LIMIT),
    )(x_r, scale1, shift1, w1_mat, b1, scale2, shift2, w2_flat, b2, coords)

    return out.reshape(n, c + g, h, w)                         # NCHW, free reshape


# ------------------------------ reference -----------------------------------

def _reference(x, p, eps=1e-5):
    def bn(v, gamma, beta):
        mean = jnp.mean(v, axis=(0, 2, 3), keepdims=True)
        var = jnp.var(v, axis=(0, 2, 3), keepdims=True)
        return (v - mean) / jnp.sqrt(var + eps) * gamma[None, :, None, None] \
            + beta[None, :, None, None]

    h = jax.nn.relu(bn(x, p["gamma1"], p["beta1"]))
    h = jax.lax.conv_general_dilated(h, p["w1"], (1, 1), "VALID",
                                     dimension_numbers=("NCHW", "OIHW", "NCHW"))
    h = h + p["b1"][None, :, None, None]
    h = jax.nn.relu(bn(h, p["gamma2"], p["beta2"]))
    h = jax.lax.conv_general_dilated(h, p["w2"], (1, 1), ((1, 1), (1, 1)),
                                     dimension_numbers=("NCHW", "OIHW", "NCHW"))
    h = h + p["b2"][None, :, None, None]
    return jnp.concatenate([x, h], axis=1)


# ------------------------------ main -----------------------------------------

if __name__ == "__main__":
    N, nChannels, H, W = 2, 4, 16, 16
    growthRate = 4
    interChannels = 4 * growthRate

    key = jax.random.PRNGKey(0)
    ks = jax.random.split(key, 9)
    params = {
        "gamma1": jax.random.uniform(ks[0], (nChannels,), jnp.float32, 0.5, 1.5),
        "beta1":  0.1 * jax.random.normal(ks[1], (nChannels,), jnp.float32),
        "w1":     0.2 * jax.random.normal(ks[2], (interChannels, nChannels, 1, 1), jnp.float32),
        "b1":     0.1 * jax.random.normal(ks[3], (interChannels,), jnp.float32),
        "gamma2": jax.random.uniform(ks[4], (interChannels,), jnp.float32, 0.5, 1.5),
        "beta2":  0.1 * jax.random.normal(ks[5], (interChannels,), jnp.float32),
        "w2":     0.2 * jax.random.normal(ks[6], (growthRate, interChannels, 3, 3), jnp.float32),
        "b2":     0.1 * jax.random.normal(ks[7], (growthRate,), jnp.float32),
    }
    x = jax.random.normal(ks[8], (N, nChannels, H, W), jnp.float32)

    out = jax.block_until_ready(jax.jit(bottleneck_forward)(x, params))
    ref = jax.block_until_ready(_reference(x, params))

    assert out.shape == (N, nChannels + growthRate, H, W), out.shape
    assert jnp.allclose(out, ref, rtol=1e-4, atol=1e-4), \
        float(jnp.max(jnp.abs(out - ref)))
    print("KERNEL_OK")
</pallas_src>

<mosaic_0001>
module attributes {stable_mosaic.version = 11 : i64} {
  func.func @_bn1_stats_kernel(%arg0: i32, %arg1: i32, %arg2: memref<1x4x256xf32, #tpu.memory_space<vmem>>, %arg3: memref<1x1x8x1xf32, #tpu.memory_space<vmem>>) attributes {dimension_semantics = [#tpu.dimension_semantics<parallel>, #tpu.dimension_semantics<parallel>], iteration_bounds = array<i64: 2, 1>, scalar_prefetch = 0 : i64, scratch_operands = 0 : i64, tpu.core_type = #tpu.core_type<tc>, window_params = [{transform_indices = @transform_0, window_bounds = array<i64: 1, 4, 256>}, {transform_indices = @transform_1, window_bounds = array<i64: 1, 1, 8, 1>}]} {
    %c0 = arith.constant 0 : index
    %c0_0 = arith.constant 0 : index
    %c0_1 = arith.constant 0 : index
    %0 = vector.load %arg2[%c0, %c0_0, %c0_1] : memref<1x4x256xf32, #tpu.memory_space<vmem>>, vector<1x4x256xf32>
    %1 = vector.shape_cast %0 : vector<1x4x256xf32> to vector<4x256xf32>
    %cst = arith.constant dense<0.000000e+00> : vector<4xf32>
    %2 = vector.multi_reduction <add>, %1, %cst [1] : vector<4x256xf32> to vector<4xf32>
    %3 = vector.shape_cast %2 : vector<4xf32> to vector<4x1xf32>
    %4 = arith.mulf %1, %1 : vector<4x256xf32>
    %cst_2 = arith.constant dense<0.000000e+00> : vector<4xf32>
    %5 = vector.multi_reduction <add>, %4, %cst_2 [1] : vector<4x256xf32> to vector<4xf32>
    %6 = vector.shape_cast %5 : vector<4xf32> to vector<4x1xf32>
    %7 = tpu.concatenate %3, %6 in 0 : vector<4x1xf32>, vector<4x1xf32> -> vector<8x1xf32>
    %c0_3 = arith.constant 0 : index
    %c0_4 = arith.constant 0 : index
    %c0_5 = arith.constant 0 : index
    %c0_6 = arith.constant 0 : index
    %8 = vector.load %arg3[%c0_3, %c0_4, %c0_5, %c0_6] : memref<1x1x8x1xf32, #tpu.memory_space<vmem>>, vector<1x1x8x1xf32>
    %9 = vector.shape_cast %8 : vector<1x1x8x1xf32> to vector<8x1xf32>
    %10 = vector.shape_cast %7 : vector<8x1xf32> to vector<1x1x8x1xf32>
    tpu.vector_store %arg3[%c0_3, %c0_4, %c0_5, %c0_6], %10 {strides = array<i32>} : memref<1x1x8x1xf32, #tpu.memory_space<vmem>>, vector<1x1x8x1xf32>,
    return
  }
  func.func @transform_0(%arg0: i32, %arg1: i32) -> (i32, i32, i32) {
    %c0_i32 = arith.constant 0 : i32
    %c0_i32_0 = arith.constant 0 : i32
    return %arg0, %c0_i32, %arg1 : i32, i32, i32
  }
  func.func @transform_1(%arg0: i32, %arg1: i32) -> (i32, i32, i32, i32) {
    %c0_i32 = arith.constant 0 : i32
    %c0_i32_0 = arith.constant 0 : i32
    %c0_i32_1 = arith.constant 0 : i32
    return %arg0, %arg1, %c0_i32, %c0_i32_0 : i32, i32, i32, i32
  }
}

module attributes {stable_mosaic.version = 11 : i64} {
  func.func @kernel(%arg0: i32, %arg1: i32, %arg2: memref<1x4x256xf32, #tpu.memory_space<vmem>>, %arg3: memref<4x1xf32, #tpu.memory_space<vmem>>, %arg4: memref<4x1xf32, #tpu.memory_space<vmem>>, %arg5: memref<16x4xf32, #tpu.memory_space<vmem>>, %arg6: memref<16x1xf32, #tpu.memory_space<vmem>>, %arg7: memref<1x1x32x1xf32, #tpu.memory_space<vmem>>) attributes {dimension_semantics = [#tpu.dimension_semantics<parallel>, #tpu.dimension_semantics<parallel>], iteration_bounds = array<i64: 2, 1>, scalar_prefetch = 0 : i64, scratch_operands = 0 : i64, tpu.core_type = #tpu.core_type<tc>, window_params = [{transform_indices = @transform_0, window_bounds = array<i64: 1, 4, 256>}, {pipeline_mode = #tpu.pipeline_mode<synchronous>, transform_indices = @transform_1, window_bounds = array<i64: 4, 1>}, {pipeline_mode = #tpu.pipeline_mode<synchronous>, transform_indices = @transform_2, window_bounds = array<i64: 4, 1>}, {pipeline_mode = #tpu.pipeline_mode<synchronous>, transform_indices = @transform_3, window_bounds = array<i64: 16, 4>}, {pipeline_mode = #tpu.pipeline_mode<synchronous>, transform_indices = @transform_4, window_bounds = array<i64: 16, 1>}, {transform_indices = @transform_5, window_bounds = array<i64: 1, 1, 32, 1>}]} {
    %c0 = arith.constant 0 : index
    %c0_0 = arith.constant 0 : index
    %c0_1 = arith.constant 0 : index
    %0 = vector.load %arg2[%c0, %c0_0, %c0_1] : memref<1x4x256xf32, #tpu.memory_space<vmem>>, vector<1x4x256xf32>
    %1 = vector.shape_cast %0 : vector<1x4x256xf32> to vector<4x256xf32>
    %c0_2 = arith.constant 0 : index
    %c0_3 = arith.constant 0 : index
    %2 = vector.load %arg3[%c0_2, %c0_3] : memref<4x1xf32, #tpu.memory_space<vmem>>, vector<4x1xf32>
    %3 = vector.broadcast %2 : vector<4x1xf32> to vector<4x256xf32>
    %4 = arith.mulf %1, %3 : vector<4x256xf32>
    %c0_4 = arith.constant 0 : index
    %c0_5 = arith.constant 0 : index
    %5 = vector.load %arg4[%c0_4, %c0_5] : memref<4x1xf32, #tpu.memory_space<vmem>>, vector<4x1xf32>
    %6 = vector.broadcast %5 : vector<4x1xf32> to vector<4x256xf32>
    %7 = arith.addf %4, %6 : vector<4x256xf32>
    %cst = arith.constant 0.000000e+00 : f32
    %8 = vector.broadcast %cst : f32 to vector<4x256xf32>
    %9 = arith.maximumf %7, %8 : vector<4x256xf32>
    %c0_6 = arith.constant 0 : index
    %c0_7 = arith.constant 0 : index
    %10 = vector.load %arg5[%c0_6, %c0_7] : memref<16x4xf32, #tpu.memory_space<vmem>>, vector<16x4xf32>
    %cst_8 = arith.constant dense<0.000000e+00> : vector<16x256xf32>
    %11 = tpu.matmul %10, %9, %cst_8 {dimension_numbers = #tpu.dot_dimension_numbers<[1], [0], [0], [1], [0, 0, 1, 1], [], []>} : vector<16x4xf32>, vector<4x256xf32>, vector<16x256xf32> -> vector<16x256xf32>
    %c0_9 = arith.constant 0 : index
    %c0_10 = arith.constant 0 : index
    %12 = vector.load %arg6[%c0_9, %c0_10] : memref<16x1xf32, #tpu.memory_space<vmem>>, vector<16x1xf32>
    %13 = vector.broadcast %12 : vector<16x1xf32> to vector<16x256xf32>
    %14 = arith.addf %11, %13 : vector<16x256xf32>
    %cst_11 = arith.constant dense<0.000000e+00> : vector<16xf32>
    %15 = vector.multi_reduction <add>, %14, %cst_11 [1] : vector<16x256xf32> to vector<16xf32>
    %16 = vector.shape_cast %15 : vector<16xf32> to vector<16x1xf32>
    %17 = arith.mulf %14, %14 : vector<16x256xf32>
    %cst_12 = arith.constant dense<0.000000e+00> : vector<16xf32>
    %18 = vector.multi_reduction <add>, %17, %cst_12 [1] : vector<16x256xf32> to vector<16xf32>
    %19 = vector.shape_cast %18 : vector<16xf32> to vector<16x1xf32>
    %20 = tpu.concatenate %16, %19 in 0 : vector<16x1xf32>, vector<16x1xf32> -> vector<32x1xf32>
    %c0_13 = arith.constant 0 : index
    %c0_14 = arith.constant 0 : index
    %c0_15 = arith.constant 0 : index
    %c0_16 = arith.constant 0 : index
    %21 = vector.load %arg7[%c0_13, %c0_14, %c0_15, %c0_16] : memref<1x1x32x1xf32, #tpu.memory_space<vmem>>, vector<1x1x32x1xf32>
    %22 = vector.shape_cast %21 : vector<1x1x32x1xf32> to vector<32x1xf32>
    %23 = vector.shape_cast %20 : vector<32x1xf32> to vector<1x1x32x1xf32>
    tpu.vector_store %arg7[%c0_13, %c0_14, %c0_15, %c0_16], %23 {strides = array<i32>} : memref<1x1x32x1xf32, #tpu.memory_space<vmem>>, vector<1x1x32x1xf32>,
    return
  }
  func.func @transform_0(%arg0: i32, %arg1: i32) -> (i32, i32, i32) {
    %c0_i32 = arith.constant 0 : i32
    %c0_i32_0 = arith.constant 0 : i32
    return %arg0, %c0_i32, %arg1 : i32, i32, i32
  }
  func.func @transform_1(%arg0: i32, %arg1: i32) -> (i32, i32) {
    %c0_i32 = arith.constant 0 : i32
    %c0_i32_0 = arith.constant 0 : i32
    %c0_i32_1 = arith.constant 0 : i32
    return %c0_i32, %c0_i32_0 : i32, i32
  }
  func.func @transform_2(%arg0: i32, %arg1: i32) -> (i32, i32) {
    %c0_i32 = arith.constant 0 : i32
    %c0_i32_0 = arith.constant 0 : i32
    %c0_i32_1 = arith.constant 0 : i32
    return %c0_i32, %c0_i32_0 : i32, i32
  }
  func.func @transform_3(%arg0: i32, %arg1: i32) -> (i32, i32) {
    %c0_i32 = arith.constant 0 : i32
    %c0_i32_0 = arith.constant 0 : i32
    %c0_i32_1 = arith.constant 0 : i32
    return %c0_i32, %c0_i32_0 : i32, i32
  }
  func.func @transform_4(%arg0: i32, %arg1: i32) -> (i32, i32) {
    %c0_i32 = arith.constant 0 : i32
    %c0_i32_0 = arith.constant 0 : i32
    %c0_i32_1 = arith.constant 0 : i32
    return %c0_i32, %c0_i32_0 : i32, i32
  }
  func.func @transform_5(%arg0: i32, %arg1: i32) -> (i32, i32, i32, i32) {
    %c0_i32 = arith.constant 0 : i32
    %c0_i32_0 = arith.constant 0 : i32
    %c0_i32_1 = arith.constant 0 : i32
    return %arg0, %arg1, %c0_i32, %c0_i32_0 : i32, i32, i32, i32
  }
}

module attributes {stable_mosaic.version = 11 : i64} {
  func.func @kernel(%arg0: i32, %arg1: memref<1x4x256xf32, #tpu.memory_space<vmem>>, %arg2: memref<4x1xf32, #tpu.memory_space<vmem>>, %arg3: memref<4x1xf32, #tpu.memory_space<vmem>>, %arg4: memref<16x4xf32, #tpu.memory_space<vmem>>, %arg5: memref<16x1xf32, #tpu.memory_space<vmem>>, %arg6: memref<16x1xf32, #tpu.memory_space<vmem>>, %arg7: memref<16x1xf32, #tpu.memory_space<vmem>>, %arg8: memref<4x144xf32, #tpu.memory_space<vmem>>, %arg9: memref<4x1xf32, #tpu.memory_space<vmem>>, %arg10: memref<2x256xi32, #tpu.memory_space<vmem>>, %arg11: memref<1x8x256xf32, #tpu.memory_space<vmem>>) attributes {dimension_semantics = [#tpu.dimension_semantics<parallel>], iteration_bounds = array<i64: 2>, scalar_prefetch = 0 : i64, scratch_operands = 0 : i64, tpu.core_type = #tpu.core_type<tc>, window_params = [{transform_indices = @transform_0, window_bounds = array<i64: 1, 4, 256>}, {pipeline_mode = #tpu.pipeline_mode<synchronous>, transform_indices = @transform_1, window_bounds = array<i64: 4, 1>}, {pipeline_mode = #tpu.pipeline_mode<synchronous>, transform_indices = @transform_2, window_bounds = array<i64: 4, 1>}, {pipeline_mode = #tpu.pipeline_mode<synchronous>, transform_indices = @transform_3, window_bounds = array<i64: 16, 4>}, {pipeline_mode = #tpu.pipeline_mode<synchronous>, transform_indices = @transform_4, window_bounds = array<i64: 16, 1>}, {pipeline_mode = #tpu.pipeline_mode<synchronous>, transform_indices = @transform_5, window_bounds = array<i64: 16, 1>}, {pipeline_mode = #tpu.pipeline_mode<synchronous>, transform_indices = @transform_6, window_bounds = array<i64: 16, 1>}, {pipeline_mode = #tpu.pipeline_mode<synchronous>, transform_indices = @transform_7, window_bounds = array<i64: 4, 144>}, {pipeline_mode = #tpu.pipeline_mode<synchronous>, transform_indices = @transform_8, window_bounds = array<i64: 4, 1>}, {pipeline_mode = #tpu.pipeline_mode<synchronous>, transform_indices = @transform_9, window_bounds = array<i64: 2, 256>}, {transform_indices = @transform_10, window_bounds = array<i64: 1, 8, 256>}]} {
    %c0 = arith.constant 0 : index
    %c0_0 = arith.constant 0 : index
    %c0_1 = arith.constant 0 : index
    %0 = vector.load %arg1[%c0, %c0_0, %c0_1] : memref<1x4x256xf32, #tpu.memory_space<vmem>>, vector<1x4x256xf32>
    %1 = vector.shape_cast %0 : vector<1x4x256xf32> to vector<4x256xf32>
    %c0_2 = arith.constant 0 : index
    %c0_3 = arith.constant 0 : index
    %2 = vector.load %arg2[%c0_2, %c0_3] : memref<4x1xf32, #tpu.memory_space<vmem>>, vector<4x1xf32>
    %3 = vector.broadcast %2 : vector<4x1xf32> to vector<4x256xf32>
    %4 = arith.mulf %1, %3 : vector<4x256xf32>
    %c0_4 = arith.constant 0 : index
    %c0_5 = arith.constant 0 : index
    %5 = vector.load %arg3[%c0_4, %c0_5] : memref<4x1xf32, #tpu.memory_space<vmem>>, vector<4x1xf32>
    %6 = vector.broadcast %5 : vector<4x1xf32> to vector<4x256xf32>
    %7 = arith.addf %4, %6 : vector<4x256xf32>
    %cst = arith.constant 0.000000e+00 : f32
    %8 = vector.broadcast %cst : f32 to vector<4x256xf32>
    %9 = arith.maximumf %7, %8 : vector<4x256xf32>
    %c0_6 = arith.constant 0 : index
    %c0_7 = arith.constant 0 : index
    %10 = vector.load %arg4[%c0_6, %c0_7] : memref<16x4xf32, #tpu.memory_space<vmem>>, vector<16x4xf32>
    %cst_8 = arith.constant dense<0.000000e+00> : vector<16x256xf32>
    %11 = tpu.matmul %10, %9, %cst_8 {dimension_numbers = #tpu.dot_dimension_numbers<[1], [0], [0], [1], [0, 0, 1, 1], [], []>} : vector<16x4xf32>, vector<4x256xf32>, vector<16x256xf32> -> vector<16x256xf32>
    %c0_9 = arith.constant 0 : index
    %c0_10 = arith.constant 0 : index
    %12 = vector.load %arg5[%c0_9, %c0_10] : memref<16x1xf32, #tpu.memory_space<vmem>>, vector<16x1xf32>
    %13 = vector.broadcast %12 : vector<16x1xf32> to vector<16x256xf32>
    %14 = arith.addf %11, %13 : vector<16x256xf32>
    %c0_11 = arith.constant 0 : index
    %c0_12 = arith.constant 0 : index
    %15 = vector.load %arg6[%c0_11, %c0_12] : memref<16x1xf32, #tpu.memory_space<vmem>>, vector<16x1xf32>
    %16 = vector.broadcast %15 : vector<16x1xf32> to vector<16x256xf32>
    %17 = arith.mulf %14, %16 : vector<16x256xf32>
    %c0_13 = arith.constant 0 : index
    %c0_14 = arith.constant 0 : index
    %18 = vector.load %arg7[%c0_13, %c0_14] : memref<16x1xf32, #tpu.memory_space<vmem>>, vector<16x1xf32>
    %19 = vector.broadcast %18 : vector<16x1xf32> to vector<16x256xf32>
    %20 = arith.addf %17, %19 : vector<16x256xf32>
    %cst_15 = arith.constant 0.000000e+00 : f32
    %21 = vector.broadcast %cst_15 : f32 to vector<16x256xf32>
    %22 = arith.maximumf %20, %21 : vector<16x256xf32>
    %c0_16 = arith.constant 0 : index
    %c0_17 = arith.constant 0 : index
    %23 = vector.load %arg10[%c0_16, %c0_17] : memref<2x256xi32, #tpu.memory_space<vmem>>, vector<2x256xi32>
    %24 = vector.extract_strided_slice %23 {offsets = [0, 0], sizes = [1, 256], strides = [1, 1]} : vector<2x256xi32> to vector<1x256xi32>
    %25 = vector.extract_strided_slice %23 {offsets = [1, 0], sizes = [1, 256], strides = [1, 1]} : vector<2x256xi32> to vector<1x256xi32>
    %c17_i32 = arith.constant 17 : i32
    %26 = tpu.dynamic_rotate %22 by %c17_i32 dim 1 : vector<16x256xf32>, i32 -> vector<16x256xf32>
    %c1_i32 = arith.constant 1 : i32
    %27 = vector.broadcast %c1_i32 : i32 to vector<1x256xi32>
    %28 = arith.cmpi sge, %24, %27 : vector<1x256xi32>
    %c1_i32_18 = arith.constant 1 : i32
    %29 = vector.broadcast %c1_i32_18 : i32 to vector<1x256xi32>
    %30 = arith.cmpi sge, %25, %29 : vector<1x256xi32>
    %31 = arith.andi %28, %30 : vector<1x256xi1>
    %cst_19 = arith.constant 0.000000e+00 : f32
    %32 = vector.shape_cast %31 : vector<1x256xi1> to vector<1x256xi1>
    %33 = vector.broadcast %32 : vector<1x256xi1> to vector<16x256xi1>
    %34 = vector.broadcast %cst_19 : f32 to vector<16x256xf32>
    %35 = arith.select %33, %26, %34 : vector<16x256xi1>, vector<16x256xf32>
    %c16_i32 = arith.constant 16 : i32
    %36 = tpu.dynamic_rotate %22 by %c16_i32 dim 1 : vector<16x256xf32>, i32 -> vector<16x256xf32>
    %c1_i32_20 = arith.constant 1 : i32
    %37 = vector.broadcast %c1_i32_20 : i32 to vector<1x256xi32>
    %38 = arith.cmpi sge, %24, %37 : vector<1x256xi32>
    %cst_21 = arith.constant 0.000000e+00 : f32
    %39 = vector.shape_cast %38 : vector<1x256xi1> to vector<1x256xi1>
    %40 = vector.broadcast %39 : vector<1x256xi1> to vector<16x256xi1>
    %41 = vector.broadcast %cst_21 : f32 to vector<16x256xf32>
    %42 = arith.select %40, %36, %41 : vector<16x256xi1>, vector<16x256xf32>
    %c15_i32 = arith.constant 15 : i32
    %43 = tpu.dynamic_rotate %22 by %c15_i32 dim 1 : vector<16x256xf32>, i32 -> vector<16x256xf32>
    %c1_i32_22 = arith.constant 1 : i32
    %44 = vector.broadcast %c1_i32_22 : i32 to vector<1x256xi32>
    %45 = arith.cmpi sge, %24, %44 : vector<1x256xi32>
    %c14_i32 = arith.constant 14 : i32
    %46 = vector.broadcast %c14_i32 : i32 to vector<1x256xi32>
    %47 = arith.cmpi sle, %25, %46 : vector<1x256xi32>
    %48 = arith.andi %45, %47 : vector<1x256xi1>
    %cst_23 = arith.constant 0.000000e+00 : f32
    %49 = vector.shape_cast %48 : vector<1x256xi1> to vector<1x256xi1>
    %50 = vector.broadcast %49 : vector<1x256xi1> to vector<16x256xi1>
    %51 = vector.broadcast %cst_23 : f32 to vector<16x256xf32>
    %52 = arith.select %50, %43, %51 : vector<16x256xi1>, vector<16x256xf32>
    %c1_i32_24 = arith.constant 1 : i32
    %53 = tpu.dynamic_rotate %22 by %c1_i32_24 dim 1 : vector<16x256xf32>, i32 -> vector<16x256xf32>
    %c1_i32_25 = arith.constant 1 : i32
    %54 = vector.broadcast %c1_i32_25 : i32 to vector<1x256xi32>
    %55 = arith.cmpi sge, %25, %54 : vector<1x256xi32>
    %cst_26 = arith.constant 0.000000e+00 : f32
    %56 = vector.shape_cast %55 : vector<1x256xi1> to vector<1x256xi1>
    %57 = vector.broadcast %56 : vector<1x256xi1> to vector<16x256xi1>
    %58 = vector.broadcast %cst_26 : f32 to vector<16x256xf32>
    %59 = arith.select %57, %53, %58 : vector<16x256xi1>, vector<16x256xf32>
    %c255_i32 = arith.constant 255 : i32
    %60 = tpu.dynamic_rotate %22 by %c255_i32 dim 1 : vector<16x256xf32>, i32 -> vector<16x256xf32>
    %c14_i32_27 = arith.constant 14 : i32
    %61 = vector.broadcast %c14_i32_27 : i32 to vector<1x256xi32>
    %62 = arith.cmpi sle, %25, %61 : vector<1x256xi32>
    %cst_28 = arith.constant 0.000000e+00 : f32
    %63 = vector.shape_cast %62 : vector<1x256xi1> to vector<1x256xi1>
    %64 = vector.broadcast %63 : vector<1x256xi1> to vector<16x256xi1>
    %65 = vector.broadcast %cst_28 : f32 to vector<16x256xf32>
    %66 = arith.select %64, %60, %65 : vector<16x256xi1>, vector<16x256xf32>
    %c241_i32 = arith.constant 241 : i32
    %67 = tpu.dynamic_rotate %22 by %c241_i32 dim 1 : vector<16x256xf32>, i32 -> vector<16x256xf32>
    %c14_i32_29 = arith.constant 14 : i32
    %68 = vector.broadcast %c14_i32_29 : i32 to vector<1x256xi32>
    %69 = arith.cmpi sle, %24, %68 : vector<1x256xi32>
    %c1_i32_30 = arith.constant 1 : i32
    %70 = vector.broadcast %c1_i32_30 : i32 to vector<1x256xi32>
    %71 = arith.cmpi sge, %25, %70 : vector<1x256xi32>
    %72 = arith.andi %69, %71 : vector<1x256xi1>
    %cst_31 = arith.constant 0.000000e+00 : f32
    %73 = vector.shape_cast %72 : vector<1x256xi1> to vector<1x256xi1>
    %74 = vector.broadcast %73 : vector<1x256xi1> to vector<16x256xi1>
    %75 = vector.broadcast %cst_31 : f32 to vector<16x256xf32>
    %76 = arith.select %74, %67, %75 : vector<16x256xi1>, vector<16x256xf32>
    %c240_i32 = arith.constant 240 : i32
    %77 = tpu.dynamic_rotate %22 by %c240_i32 dim 1 : vector<16x256xf32>, i32 -> vector<16x256xf32>
    %c14_i32_32 = arith.constant 14 : i32
    %78 = vector.broadcast %c14_i32_32 : i32 to vector<1x256xi32>
    %79 = arith.cmpi sle, %24, %78 : vector<1x256xi32>
    %cst_33 = arith.constant 0.000000e+00 : f32
    %80 = vector.shape_cast %79 : vector<1x256xi1> to vector<1x256xi1>
    %81 = vector.broadcast %80 : vector<1x256xi1> to vector<16x256xi1>
    %82 = vector.broadcast %cst_33 : f32 to vector<16x256xf32>
    %83 = arith.select %81, %77, %82 : vector<16x256xi1>, vector<16x256xf32>
    %c239_i32 = arith.constant 239 : i32
    %84 = tpu.dynamic_rotate %22 by %c239_i32 dim 1 : vector<16x256xf32>, i32 -> vector<16x256xf32>
    %c14_i32_34 = arith.constant 14 : i32
    %85 = vector.broadcast %c14_i32_34 : i32 to vector<1x256xi32>
    %86 = arith.cmpi sle, %24, %85 : vector<1x256xi32>
    %c14_i32_35 = arith.constant 14 : i32
    %87 = vector.broadcast %c14_i32_35 : i32 to vector<1x256xi32>
    %88 = arith.cmpi sle, %25, %87 : vector<1x256xi32>
    %89 = arith.andi %86, %88 : vector<1x256xi1>
    %cst_36 = arith.constant 0.000000e+00 : f32
    %90 = vector.shape_cast %89 : vector<1x256xi1> to vector<1x256xi1>
    %91 = vector.broadcast %90 : vector<1x256xi1> to vector<16x256xi1>
    %92 = vector.broadcast %cst_36 : f32 to vector<16x256xf32>
    %93 = arith.select %91, %84, %92 : vector<16x256xi1>, vector<16x256xf32>
    %94 = tpu.concatenate %35, %42, %52, %59, %22, %66, %76, %83, %93 in 0 : vector<16x256xf32>, vector<16x256xf32>, vector<16x256xf32>, vector<16x256xf32>, vector<16x256xf32>, vector<16x256xf32>, vector<16x256xf32>, vector<16x256xf32>, vector<16x256xf32> -> vector<144x256xf32>
    %c0_37 = arith.constant 0 : index
    %c0_38 = arith.constant 0 : index
    %95 = vector.load %arg8[%c0_37, %c0_38] : memref<4x144xf32, #tpu.memory_space<vmem>>, vector<4x144xf32>
    %cst_39 = arith.constant dense<0.000000e+00> : vector<4x256xf32>
    %96 = tpu.matmul %95, %94, %cst_39 {dimension_numbers = #tpu.dot_dimension_numbers<[1], [0], [0], [1], [0, 0, 1, 1], [], []>} : vector<4x144xf32>, vector<144x256xf32>, vector<4x256xf32> -> vector<4x256xf32>
    %c0_40 = arith.constant 0 : index
    %c0_41 = arith.constant 0 : index
    %97 = vector.load %arg9[%c0_40, %c0_41] : memref<4x1xf32, #tpu.memory_space<vmem>>, vector<4x1xf32>
    %98 = vector.broadcast %97 : vector<4x1xf32> to vector<4x256xf32>
    %99 = arith.addf %96, %98 : vector<4x256xf32>
    %100 = tpu.concatenate %1, %99 in 0 : vector<4x256xf32>, vector<4x256xf32> -> vector<8x256xf32>
    %c0_42 = arith.constant 0 : index
    %c0_43 = arith.constant 0 : index
    %c0_44 = arith.constant 0 : index
    %101 = vector.load %arg11[%c0_42, %c0_43, %c0_44] : memref<1x8x256xf32, #tpu.memory_space<vmem>>, vector<1x8x256xf32>
    %102 = vector.shape_cast %101 : vector<1x8x256xf32> to vector<8x256xf32>
    %103 = vector.shape_cast %100 : vector<8x256xf32> to vector<1x8x256xf32>
    tpu.vector_store %arg11[%c0_42, %c0_43, %c0_44], %103 {strides = array<i32>} : memref<1x8x256xf32, #tpu.memory_space<vmem>>, vector<1x8x256xf32>,
    return
  }
  func.func @transform_0(%arg0: i32) -> (i32, i32, i32) {
    %c0_i32 = arith.constant 0 : i32
    %c0_i32_0 = arith.constant 0 : i32
    %c0_i32_1 = arith.constant 0 : i32
    return %arg0, %c0_i32, %c0_i32_0 : i32, i32, i32
  }
  func.func @transform_1(%arg0: i32) -> (i32, i32) {
    %c0_i32 = arith.constant 0 : i32
    %c0_i32_0 = arith.constant 0 : i32
    %c0_i32_1 = arith.constant 0 : i32
    return %c0_i32, %c0_i32_0 : i32, i32
  }
  func.func @transform_2(%arg0: i32) -> (i32, i32) {
    %c0_i32 = arith.constant 0 : i32
    %c0_i32_0 = arith.constant 0 : i32
    %c0_i32_1 = arith.constant 0 : i32
    return %c0_i32, %c0_i32_0 : i32, i32
  }
  func.func @transform_3(%arg0: i32) -> (i32, i32) {
    %c0_i32 = arith.constant 0 : i32
    %c0_i32_0 = arith.constant 0 : i32
    %c0_i32_1 = arith.constant 0 : i32
    return %c0_i32, %c0_i32_0 : i32, i32
  }
  func.func @transform_4(%arg0: i32) -> (i32, i32) {
    %c0_i32 = arith.constant 0 : i32
    %c0_i32_0 = arith.constant 0 : i32
    %c0_i32_1 = arith.constant 0 : i32
    return %c0_i32, %c0_i32_0 : i32, i32
  }
  func.func @transform_5(%arg0: i32) -> (i32, i32) {
    %c0_i32 = arith.constant 0 : i32
    %c0_i32_0 = arith.constant 0 : i32
    %c0_i32_1 = arith.constant 0 : i32
    return %c0_i32, %c0_i32_0 : i32, i32
  }
  func.func @transform_6(%arg0: i32) -> (i32, i32) {
    %c0_i32 = arith.constant 0 : i32
    %c0_i32_0 = arith.constant 0 : i32
    %c0_i32_1 = arith.constant 0 : i32
    return %c0_i32, %c0_i32_0 : i32, i32
  }
  func.func @transform_7(%arg0: i32) -> (i32, i32) {
    %c0_i32 = arith.constant 0 : i32
    %c0_i32_0 = arith.constant 0 : i32
    %c0_i32_1 = arith.constant 0 : i32
    return %c0_i32, %c0_i32_0 : i32, i32
  }
  func.func @transform_8(%arg0: i32) -> (i32, i32) {
    %c0_i32 = arith.constant 0 : i32
    %c0_i32_0 = arith.constant 0 : i32
    %c0_i32_1 = arith.constant 0 : i32
    return %c0_i32, %c0_i32_0 : i32, i32
  }
  func.func @transform_9(%arg0: i32) -> (i32, i32) {
    %c0_i32 = arith.constant 0 : i32
    %c0_i32_0 = arith.constant 0 : i32
    %c0_i32_1 = arith.constant 0 : i32
    return %c0_i32, %c0_i32_0 : i32, i32
  }
  func.func @transform_10(%arg0: i32) -> (i32, i32, i32) {
    %c0_i32 = arith.constant 0 : i32
    %c0_i32_0 = arith.constant 0 : i32
    %c0_i32_1 = arith.constant 0 : i32
    return %arg0, %c0_i32, %c0_i32_0 : i32, i32, i32
  }
}

</mosaic_0001>

<llo_original>
// kernel: bottleneck_forward.3
$region0: #{bottleneck_forward.3}
  #allocation0 [shape = 'u32[]', space=smem, size = 0x4, offset = 0x4, fixed_abs, tag = 'smem constant byte address 0x4 - core index']
  #allocation1 [shape = 'u32[144,128]{1,0:T(1,128)}', space=vmem, size = 0x12000, scoped, tag = 'internal scratch']
  %s0 = inlined_call_operand.vmem [shape: f32[2,4,256], index: 0, kind: input, shape index: {}]
  %s1 = inlined_call_operand.vmem [shape: f32[2,1,8,1], index: 1, kind: output, shape index: {}]
  %s2 = sld [smem:[#allocation0]]
  $region37: #{bottleneck_forward.3} parent=0
    _
  %s4 = ssub.s32 1, %s2
  %s5 = scalar_select 0, %s4, %s2
  loop: start=0, step=1, limit=4
  $region2: #{bottleneck_forward.3} parent=0 // loop_pre_header
    _
  $region3: #{bottleneck_forward.3} parent=0 // loop_header
    %s7 = sphi 0, %s11
    %p8 = scmp.ge.s32.totalorder %s7, 4
    %s14 = sphi 0, %s26
    %s15 = sphi 0, %s22
    %s16 = sphi 0, %s14
    %s17 = sphi 0, %s15
    %s18 = sphi 0, %s16
    %s19 = sphi 0, %s17
    %s31 = sphi 0, %s33
    %s34 = sphi 0, %s31
    %s35 = sphi 0, %s34
    %s51 = sphi 0, %s35
    %s59 = sphi 0, %s61
    %s62 = sphi 0, %s59
    %s63 = sphi 0, %s62
    %s79 = sphi 0, %s63
  $region4: #{bottleneck_forward.3} parent=0 // loop_header_branch
    %10 = sbr.rel (%p8) target = $region8
  $region5: #{bottleneck_forward.3} parent=0 // loop_body
    %s12 = ssub.s32 %s7, 1
    %s13 = ssub.s32 %s7, 2
    %s20 = sadd.s32 1, %s15
    %p21 = scmp.ge.s32.totalorder %s20, 1
    %s22 = scalar_select %p21, 0, %s20
    %s23 = sadd.s32 1, %s14
    %s24 = scalar_select %p21, %s23, %s14
    %p25 = scmp.ge.s32.totalorder %s24, 2
    %s26 = scalar_select %p25, 0, %s24
    %s27 = ssub.s32 %s14, %s26
    %s28 = ssub.s32 %s15, %s22
    %s29 = sor.u32 %s27, %s28
    %p30 = scmp.eq.s32.totalorder %s29, 0
    %s32 = sadd.s32 %s31, 1
    %s33 = scalar_select %p30, %s31, %s32
    %p36 = pneg %p30
    %p37 = scmp.eq.s32.totalorder %s7, 1
    %p38 = por %p36, %p37
    %p39 = scmp.ne.s32.totalorder %s31, %s34
    %p40 = scmp.eq.s32.totalorder %s7, 0
    %p41 = por %p39, %p40
    %p42 = scmp.ne.s32.totalorder %s31, %s34
    %p43 = scmp.eq.s32.totalorder %s12, 1
    %p44 = por %p42, %p43
    %p45 = scmp.ne.s32.totalorder %s34, %s35
    %p46 = scmp.eq.s32.totalorder %s12, 0
    %p47 = por %p45, %p46
    %p48 = scmp.ne.s32.totalorder %s34, %s35
    %p49 = scmp.eq.s32.totalorder %s13, 1
    %p50 = por %p48, %p49
    %p52 = scmp.ne.s32.totalorder %s35, %s51
    %p53 = scmp.eq.s32.totalorder %s13, 0
    %p54 = por %p52, %p53
    %s55 = ssub.s32 %s14, %s26
    %s56 = ssub.s32 %s15, %s22
    %s57 = sor.u32 %s55, %s56
    %p58 = scmp.eq.s32.totalorder %s57, 0
    %s60 = sadd.s32 %s59, 1
    %s61 = scalar_select %p58, %s59, %s60
    %p64 = pneg %p58
    %p65 = scmp.eq.s32.totalorder %s7, 1
    %p66 = por %p64, %p65
    %p67 = scmp.ne.s32.totalorder %s59, %s62
    %p68 = scmp.eq.s32.totalorder %s7, 0
    %p69 = por %p67, %p68
    %p70 = scmp.ne.s32.totalorder %s59, %s62
    %p71 = scmp.eq.s32.totalorder %s12, 1
    %p72 = por %p70, %p71
    %p73 = scmp.ne.s32.totalorder %s62, %s63
    %p74 = scmp.eq.s32.totalorder %s12, 0
    %p75 = por %p73, %p74
    %p76 = scmp.ne.s32.totalorder %s62, %s63
    %p77 = scmp.eq.s32.totalorder %s13, 1
    %p78 = por %p76, %p77
    %p80 = scmp.ne.s32.totalorder %s63, %s79
    %p81 = scmp.eq.s32.totalorder %s13, 0
    %p82 = por %p80, %p81
    %p83 = scmp.le.s32.totalorder 1, %s7
    %p84 = scmp.lt.s32.totalorder %s7, 3
    %p85 = pnand %p83, %p84
    %p86 = pneg %p85
    // Predicated region
    $region9: #{bottleneck_forward.3} parent=5 // pred_check
      _
    $region10: #{bottleneck_forward.3} parent=5 // pred_check_branch
      %88 = sbr.rel (%p85) target = $region12
    $region11: #{bottleneck_forward.3} parent=5 // pred_region
      %s89 = ssub.s32 %s7, 1
    $region12: #{bottleneck_forward.3} parent=5 // pred_fallthru
      _
    %p90 = scmp.lt.s32.totalorder %s7, 2
    // Predicated region
    $region13: #{bottleneck_forward.3} parent=5 // pred_check
      %p91 = pneg %p90
    $region14: #{bottleneck_forward.3} parent=5 // pred_check_branch
      %93 = sbr.rel (%p91) target = $region16
    $region15: #{bottleneck_forward.3} parent=5 // pred_region
      // Predicated region
      $region17: #{bottleneck_forward.3} parent=15 // pred_check
        %p94 = pneg %p41
      $region18: #{bottleneck_forward.3} parent=15 // pred_check_branch
        %96 = sbr.rel (%p94) target = $region20
      $region19: #{bottleneck_forward.3} parent=15 // pred_region
        %s97 = smul.u32 2, %s15
        %p98 = scmp.lt.s32.totalorder %s14, 1
        %s99 = scalar_select %p98, %s14, 1
        %p100 = scmp.lt.s32.totalorder %s97, 1
        %s101 = scalar_select %p100, %s97, 1
        %s102 = smul.addr %s99, 2
        %s103 = sadd.s32 %s101, %s102
        %s104 = smul.addr %s103, 4
        %s105 = scalar_lea.vmem %s0, %s104
        %s106 = smul.u32 2, %s15
      $region20: #{bottleneck_forward.3} parent=15 // pred_fallthru
        _
    $region16: #{bottleneck_forward.3} parent=5 // pred_fallthru
      _
    %p107 = scmp.le.s32.totalorder 1, %s7
    %p108 = scmp.lt.s32.totalorder %s7, 3
    %p109 = pnand %p107, %p108
    %p110 = pneg %p109
    // Predicated region
    $region21: #{bottleneck_forward.3} parent=5 // pred_check
      _
    $region22: #{bottleneck_forward.3} parent=5 // pred_check_branch
      %112 = sbr.rel (%p109) target = $region24
    $region23: #{bottleneck_forward.3} parent=5 // pred_region
      %s113 = ssub.s32 %s7, 1
      %s114 = smul.u32 2, %s17
      %p115 = scmp.lt.s32.totalorder %s16, 1
      %s116 = scalar_select %p115, %s16, 1
      %p117 = scmp.lt.s32.totalorder %s114, 1
      %s118 = scalar_select %p117, %s114, 1
      %s119 = smul.addr %s116, 2
      %s120 = sadd.s32 %s118, %s119
      %s121 = smul.addr %s120, 4
      %s122 = scalar_lea.vmem %s0, %s121
      %p123 = pneg %p47
      %p124 = pneg %p44
      %p125 = pneg %p75
      %p126 = pneg %p72
      %p127 = scmp.lt.s32.totalorder %s16, 1
      %s128 = scalar_select %p127, %s16, 1
      %p129 = scmp.lt.s32.totalorder %s17, 0
      %s130 = scalar_select %p129, %s17, 0
      %s131 = sadd.s32 %s130, %s128
      %s132 = smul.addr %s131, 8
      %s133 = scalar_lea.vmem %s1, %s132
      %s134 = smul.u32 2, %s17
      %p135 = scmp.lt.s32.totalorder %s16, 1
      %s136 = scalar_select %p135, %s16, 1
      %p137 = scmp.lt.s32.totalorder %s134, 1
      %s138 = scalar_select %p137, %s134, 1
      %s139 = smul.addr %s136, 2
      %s140 = sadd.s32 %s138, %s139
      %s141 = smul.addr %s140, 4
      %s142 = scalar_lea.vmem %s0, %s141
      %s143 = smul.u32 2, %s17
      %p144 = scmp.lt.s32.totalorder %s16, 1
      %s145 = scalar_select %p144, %s16, 1
      %p146 = scmp.lt.s32.totalorder %s17, 0
      %s147 = scalar_select %p146, %s17, 0
      %s148 = sadd.s32 %s147, %s145
      %s149 = smul.addr %s148, 8
      %s150 = scalar_lea.vmem %s1, %s149
      %v151 = vld [vmem:[%s142] sm:$0xff]
      %v153 = vcombine.high %v151, %v151
      %vm155 = vcmask 1043456
      %v156 = vsel %vm155, %v151, 0.0
      %v157 = vsel %vm155, %v153, 0.0
      %v158 = vadd.f32 %v156, %v157
      %159 = vadd.xlane.f32.xlu0 %v158
      %v160 = vpop.xlane.xlu0 %159
      %v161 = vmul.f32 %v151, %v151
      %v163 = vcombine.high %v161, %v161
      %v165 = vsel %vm155, %v161, 0.0
      %v166 = vsel %vm155, %v163, 0.0
      %v167 = vadd.f32 %v165, %v166
      %168 = vadd.xlane.f32.xlu0 %v167
      %v169 = vpop.xlane.xlu0 %168
      %v171 = vrot.slane %v169, 4
      %v173 = vsel %vm155, %v160, %v171
      %vm174 = vcmask 7168
      %175 = vst.msk [vmem:[%s150] sm:$0xff] %vm174, %v173
      %p176 = scmp.lt.s32.totalorder %s16, 1
      %s177 = scalar_select %p176, %s16, 1
      %p178 = scmp.lt.s32.totalorder %s17, 0
      %s179 = scalar_select %p178, %s17, 0
      %s180 = sadd.s32 %s179, %s177
      %s181 = smul.addr %s180, 8
      %s182 = scalar_lea.vmem %s1, %s181
      // Predicated region
      $region25: #{bottleneck_forward.3} parent=23 // pred_check
        %p183 = pneg %p72
      $region26: #{bottleneck_forward.3} parent=23 // pred_check_branch
        %185 = sbr.rel (%p183) target = $region28
      $region27: #{bottleneck_forward.3} parent=23 // pred_region
        _
      $region28: #{bottleneck_forward.3} parent=23 // pred_fallthru
        _
    $region24: #{bottleneck_forward.3} parent=5 // pred_fallthru
      _
    %p186 = scmp.le.s32.totalorder 2, %s7
    // Predicated region
    $region29: #{bottleneck_forward.3} parent=5 // pred_check
      %p187 = pneg %p186
    $region30: #{bottleneck_forward.3} parent=5 // pred_check_branch
      %189 = sbr.rel (%p187) target = $region32
    $region31: #{bottleneck_forward.3} parent=5 // pred_region
      %s190 = ssub.s32 %s7, 2
      // Predicated region
      $region33: #{bottleneck_forward.3} parent=31 // pred_check
        %p191 = pneg %p78
      $region34: #{bottleneck_forward.3} parent=31 // pred_check_branch
        %193 = sbr.rel (%p191) target = $region36
      $region35: #{bottleneck_forward.3} parent=31 // pred_region
        %p194 = scmp.lt.s32.totalorder %s18, 1
        %s195 = scalar_select %p194, %s18, 1
        %p196 = scmp.lt.s32.totalorder %s19, 0
        %s197 = scalar_select %p196, %s19, 0
        %s198 = sadd.s32 %s197, %s195
        %s199 = smul.addr %s198, 8
        %s200 = scalar_lea.vmem %s1, %s199
      $region36: #{bottleneck_forward.3} parent=31 // pred_fallthru
        _
    $region32: #{bottleneck_forward.3} parent=5 // pred_fallthru
      _
  $region6: #{bottleneck_forward.3} parent=0 // loop_footer
    %s11 = sadd.s32 1, %s7
  $region7: #{bottleneck_forward.3} parent=0 // loop_footer_branch
    %6 = sbr.rel target = $region3
  $region8: #{bottleneck_forward.3} parent=0 // loop_exit
    _

// kernel: bottleneck_forward.4
$region0: #{bottleneck_forward.4}
  #allocation0 [shape = 'u32[]', space=smem, size = 0x4, offset = 0x4, fixed_abs, tag = 'smem constant byte address 0x4 - core index']
  #allocation1 [shape = 'u32[144,128]{1,0:T(1,128)}', space=vmem, size = 0x12000, scoped, tag = 'internal scratch']
  %s0 = inlined_call_operand.vmem [shape: f32[2,4,256], index: 0, kind: input, shape index: {}]
  %s1 = inlined_call_operand.vmem [shape: f32[4,1], index: 1, kind: input, shape index: {}]
  %s2 = inlined_call_operand.vmem [shape: f32[4,1], index: 2, kind: input, shape index: {}]
  %s3 = inlined_call_operand.vmem [shape: f32[16,4], index: 3, kind: input, shape index: {}]
  %s4 = inlined_call_operand.vmem [shape: f32[16,1], index: 4, kind: input, shape index: {}]
  %s5 = inlined_call_operand.vmem [shape: f32[2,1,32,1], index: 5, kind: output, shape index: {}]
  %s6 = sld [smem:[#allocation0]]
  $region53: #{bottleneck_forward.4} parent=0
    _
  %s8 = ssub.s32 1, %s6
  %s9 = scalar_select 0, %s8, %s6
  loop: start=0, step=1, limit=4
  $region2: #{bottleneck_forward.4} parent=0 // loop_pre_header
    _
  $region3: #{bottleneck_forward.4} parent=0 // loop_header
    %s11 = sphi 0, %s15
    %p12 = scmp.ge.s32.totalorder %s11, 4
    %s18 = sphi 0, %s30
    %s19 = sphi 0, %s26
    %s20 = sphi 0, %s18
    %s21 = sphi 0, %s19
    %s22 = sphi 0, %s20
    %s23 = sphi 0, %s21
    %s35 = sphi 0, %s37
    %s38 = sphi 0, %s35
    %s39 = sphi 0, %s38
    %s55 = sphi 0, %s39
    %s59 = sphi 0, %s59
    %s61 = sphi 0, %s59
    %s62 = sphi 0, %s61
    %s76 = sphi 0, %s62
    %s80 = sphi 0, %s80
    %s82 = sphi 0, %s80
    %s83 = sphi 0, %s82
    %s97 = sphi 0, %s83
    %s101 = sphi 0, %s101
    %s103 = sphi 0, %s101
    %s104 = sphi 0, %s103
    %s118 = sphi 0, %s104
    %s122 = sphi 0, %s122
    %s124 = sphi 0, %s122
    %s125 = sphi 0, %s124
    %s139 = sphi 0, %s125
    %s147 = sphi 0, %s149
    %s150 = sphi 0, %s147
    %s151 = sphi 0, %s150
    %s167 = sphi 0, %s151
  $region4: #{bottleneck_forward.4} parent=0 // loop_header_branch
    %14 = sbr.rel (%p12) target = $region8
  $region5: #{bottleneck_forward.4} parent=0 // loop_body
    %s16 = ssub.s32 %s11, 1
    %s17 = ssub.s32 %s11, 2
    %s24 = sadd.s32 1, %s19
    %p25 = scmp.ge.s32.totalorder %s24, 1
    %s26 = scalar_select %p25, 0, %s24
    %s27 = sadd.s32 1, %s18
    %s28 = scalar_select %p25, %s27, %s18
    %p29 = scmp.ge.s32.totalorder %s28, 2
    %s30 = scalar_select %p29, 0, %s28
    %s31 = ssub.s32 %s18, %s30
    %s32 = ssub.s32 %s19, %s26
    %s33 = sor.u32 %s31, %s32
    %p34 = scmp.eq.s32.totalorder %s33, 0
    %s36 = sadd.s32 %s35, 1
    %s37 = scalar_select %p34, %s35, %s36
    %p40 = pneg %p34
    %p41 = scmp.eq.s32.totalorder %s11, 1
    %p42 = por %p40, %p41
    %p43 = scmp.ne.s32.totalorder %s35, %s38
    %p44 = scmp.eq.s32.totalorder %s11, 0
    %p45 = por %p43, %p44
    %p46 = scmp.ne.s32.totalorder %s35, %s38
    %p47 = scmp.eq.s32.totalorder %s16, 1
    %p48 = por %p46, %p47
    %p49 = scmp.ne.s32.totalorder %s38, %s39
    %p50 = scmp.eq.s32.totalorder %s16, 0
    %p51 = por %p49, %p50
    %p52 = scmp.ne.s32.totalorder %s38, %s39
    %p53 = scmp.eq.s32.totalorder %s17, 1
    %p54 = por %p52, %p53
    %p56 = scmp.ne.s32.totalorder %s39, %s55
    %p57 = scmp.eq.s32.totalorder %s17, 0
    %p58 = por %p56, %p57
    %s60 = sadd.s32 %s59, 1
    %p63 = scmp.eq.s32.totalorder %s11, 1
    %p64 = scmp.ne.s32.totalorder %s59, %s61
    %p65 = scmp.eq.s32.totalorder %s11, 0
    %p66 = por %p64, %p65
    %p67 = scmp.ne.s32.totalorder %s59, %s61
    %p68 = scmp.eq.s32.totalorder %s16, 1
    %p69 = por %p67, %p68
    %p70 = scmp.ne.s32.totalorder %s61, %s62
    %p71 = scmp.eq.s32.totalorder %s16, 0
    %p72 = por %p70, %p71
    %p73 = scmp.ne.s32.totalorder %s61, %s62
    %p74 = scmp.eq.s32.totalorder %s17, 1
    %p75 = por %p73, %p74
    %p77 = scmp.ne.s32.totalorder %s62, %s76
    %p78 = scmp.eq.s32.totalorder %s17, 0
    %p79 = por %p77, %p78
    %s81 = sadd.s32 %s80, 1
    %p84 = scmp.eq.s32.totalorder %s11, 1
    %p85 = scmp.ne.s32.totalorder %s80, %s82
    %p86 = scmp.eq.s32.totalorder %s11, 0
    %p87 = por %p85, %p86
    %p88 = scmp.ne.s32.totalorder %s80, %s82
    %p89 = scmp.eq.s32.totalorder %s16, 1
    %p90 = por %p88, %p89
    %p91 = scmp.ne.s32.totalorder %s82, %s83
    %p92 = scmp.eq.s32.totalorder %s16, 0
    %p93 = por %p91, %p92
    %p94 = scmp.ne.s32.totalorder %s82, %s83
    %p95 = scmp.eq.s32.totalorder %s17, 1
    %p96 = por %p94, %p95
    %p98 = scmp.ne.s32.totalorder %s83, %s97
    %p99 = scmp.eq.s32.totalorder %s17, 0
    %p100 = por %p98, %p99
    %s102 = sadd.s32 %s101, 1
    %p105 = scmp.eq.s32.totalorder %s11, 1
    %p106 = scmp.ne.s32.totalorder %s101, %s103
    %p107 = scmp.eq.s32.totalorder %s11, 0
    %p108 = por %p106, %p107
    %p109 = scmp.ne.s32.totalorder %s101, %s103
    %p110 = scmp.eq.s32.totalorder %s16, 1
    %p111 = por %p109, %p110
    %p112 = scmp.ne.s32.totalorder %s103, %s104
    %p113 = scmp.eq.s32.totalorder %s16, 0
    %p114 = por %p112, %p113
    %p115 = scmp.ne.s32.totalorder %s103, %s104
    %p116 = scmp.eq.s32.totalorder %s17, 1
    %p117 = por %p115, %p116
    %p119 = scmp.ne.s32.totalorder %s104, %s118
    %p120 = scmp.eq.s32.totalorder %s17, 0
    %p121 = por %p119, %p120
    %s123 = sadd.s32 %s122, 1
    %p126 = scmp.eq.s32.totalorder %s11, 1
    %p127 = scmp.ne.s32.totalorder %s122, %s124
    %p128 = scmp.eq.s32.totalorder %s11, 0
    %p129 = por %p127, %p128
    %p130 = scmp.ne.s32.totalorder %s122, %s124
    %p131 = scmp.eq.s32.totalorder %s16, 1
    %p132 = por %p130, %p131
    %p133 = scmp.ne.s32.totalorder %s124, %s125
    %p134 = scmp.eq.s32.totalorder %s16, 0
    %p135 = por %p133, %p134
    %p136 = scmp.ne.s32.totalorder %s124, %s125
    %p137 = scmp.eq.s32.totalorder %s17, 1
    %p138 = por %p136, %p137
    %p140 = scmp.ne.s32.totalorder %s125, %s139
    %p141 = scmp.eq.s32.totalorder %s17, 0
    %p142 = por %p140, %p141
    %s143 = ssub.s32 %s18, %s30
    %s144 = ssub.s32 %s19, %s26
    %s145 = sor.u32 %s143, %s144
    %p146 = scmp.eq.s32.totalorder %s145, 0
    %s148 = sadd.s32 %s147, 1
    %s149 = scalar_select %p146, %s147, %s148
    %p152 = pneg %p146
    %p153 = scmp.eq.s32.totalorder %s11, 1
    %p154 = por %p152, %p153
    %p155 = scmp.ne.s32.totalorder %s147, %s150
    %p156 = scmp.eq.s32.totalorder %s11, 0
    %p157 = por %p155, %p156
    %p158 = scmp.ne.s32.totalorder %s147, %s150
    %p159 = scmp.eq.s32.totalorder %s16, 1
    %p160 = por %p158, %p159
    %p161 = scmp.ne.s32.totalorder %s150, %s151
    %p162 = scmp.eq.s32.totalorder %s16, 0
    %p163 = por %p161, %p162
    %p164 = scmp.ne.s32.totalorder %s150, %s151
    %p165 = scmp.eq.s32.totalorder %s17, 1
    %p166 = por %p164, %p165
    %p168 = scmp.ne.s32.totalorder %s151, %s167
    %p169 = scmp.eq.s32.totalorder %s17, 0
    %p170 = por %p168, %p169
    %p171 = scmp.le.s32.totalorder 1, %s11
    %p172 = scmp.lt.s32.totalorder %s11, 3
    %p173 = pnand %p171, %p172
    %p174 = pneg %p173
    // Predicated region
    $region9: #{bottleneck_forward.4} parent=5 // pred_check
      _
    $region10: #{bottleneck_forward.4} parent=5 // pred_check_branch
      %176 = sbr.rel (%p173) target = $region12
    $region11: #{bottleneck_forward.4} parent=5 // pred_region
      %s177 = ssub.s32 %s11, 1
      // Predicated region
      $region13: #{bottleneck_forward.4} parent=11 // pred_check
        %p178 = pneg %p72
      $region14: #{bottleneck_forward.4} parent=11 // pred_check_branch
        %180 = sbr.rel (%p178) target = $region16
      $region15: #{bottleneck_forward.4} parent=11 // pred_region
        _
      $region16: #{bottleneck_forward.4} parent=11 // pred_fallthru
        _
      // Predicated region
      $region17: #{bottleneck_forward.4} parent=11 // pred_check
        %p181 = pneg %p93
      $region18: #{bottleneck_forward.4} parent=11 // pred_check_branch
        %183 = sbr.rel (%p181) target = $region20
      $region19: #{bottleneck_forward.4} parent=11 // pred_region
        _
      $region20: #{bottleneck_forward.4} parent=11 // pred_fallthru
        _
      // Predicated region
      $region21: #{bottleneck_forward.4} parent=11 // pred_check
        %p184 = pneg %p114
      $region22: #{bottleneck_forward.4} parent=11 // pred_check_branch
        %186 = sbr.rel (%p184) target = $region24
      $region23: #{bottleneck_forward.4} parent=11 // pred_region
        _
      $region24: #{bottleneck_forward.4} parent=11 // pred_fallthru
        _
      // Predicated region
      $region25: #{bottleneck_forward.4} parent=11 // pred_check
        %p187 = pneg %p135
      $region26: #{bottleneck_forward.4} parent=11 // pred_check_branch
        %189 = sbr.rel (%p187) target = $region28
      $region27: #{bottleneck_forward.4} parent=11 // pred_region
        _
      $region28: #{bottleneck_forward.4} parent=11 // pred_fallthru
        _
    $region12: #{bottleneck_forward.4} parent=5 // pred_fallthru
      _
    %p190 = scmp.lt.s32.totalorder %s11, 2
    // Predicated region
    $region29: #{bottleneck_forward.4} parent=5 // pred_check
      %p191 = pneg %p190
    $region30: #{bottleneck_forward.4} parent=5 // pred_check_branch
      %193 = sbr.rel (%p191) target = $region32
    $region31: #{bottleneck_forward.4} parent=5 // pred_region
      // Predicated region
      $region33: #{bottleneck_forward.4} parent=31 // pred_check
        %p194 = pneg %p45
      $region34: #{bottleneck_forward.4} parent=31 // pred_check_branch
        %196 = sbr.rel (%p194) target = $region36
      $region35: #{bottleneck_forward.4} parent=31 // pred_region
        %s197 = smul.u32 2, %s19
        %p198 = scmp.lt.s32.totalorder %s18, 1
        %s199 = scalar_select %p198, %s18, 1
        %p200 = scmp.lt.s32.totalorder %s197, 1
        %s201 = scalar_select %p200, %s197, 1
        %s202 = smul.addr %s199, 2
        %s203 = sadd.s32 %s201, %s202
        %s204 = smul.addr %s203, 4
        %s205 = scalar_lea.vmem %s0, %s204
        %s206 = smul.u32 2, %s19
      $region36: #{bottleneck_forward.4} parent=31 // pred_fallthru
        _
    $region32: #{bottleneck_forward.4} parent=5 // pred_fallthru
      _
    %p207 = scmp.le.s32.totalorder 1, %s11
    %p208 = scmp.lt.s32.totalorder %s11, 3
    %p209 = pnand %p207, %p208
    %p210 = pneg %p209
    // Predicated region
    $region37: #{bottleneck_forward.4} parent=5 // pred_check
      _
    $region38: #{bottleneck_forward.4} parent=5 // pred_check_branch
      %212 = sbr.rel (%p209) target = $region40
    $region39: #{bottleneck_forward.4} parent=5 // pred_region
      %s213 = ssub.s32 %s11, 1
      %s214 = smul.u32 2, %s21
      %p215 = scmp.lt.s32.totalorder %s20, 1
      %s216 = scalar_select %p215, %s20, 1
      %p217 = scmp.lt.s32.totalorder %s214, 1
      %s218 = scalar_select %p217, %s214, 1
      %s219 = smul.addr %s216, 2
      %s220 = sadd.s32 %s218, %s219
      %s221 = smul.addr %s220, 4
      %s222 = scalar_lea.vmem %s0, %s221
      %p223 = pneg %p51
      %p224 = pneg %p48
      %p225 = pneg %p72
      %p226 = pneg %p69
      %p227 = pneg %p93
      %p228 = pneg %p90
      %p229 = pneg %p114
      %p230 = pneg %p111
      %p231 = pneg %p135
      %p232 = pneg %p132
      %p233 = pneg %p163
      %p234 = pneg %p160
      %p235 = scmp.lt.s32.totalorder %s20, 1
      %s236 = scalar_select %p235, %s20, 1
      %p237 = scmp.lt.s32.totalorder %s21, 0
      %s238 = scalar_select %p237, %s21, 0
      %s239 = smul.addr %s238, 4
      %s240 = smul.addr %s236, 4
      %s241 = sadd.s32 %s239, %s240
      %s242 = smul.addr %s241, 8
      %s243 = scalar_lea.vmem %s5, %s242
      %s244 = smul.u32 2, %s21
      %p245 = scmp.lt.s32.totalorder %s20, 1
      %s246 = scalar_select %p245, %s20, 1
      %p247 = scmp.lt.s32.totalorder %s244, 1
      %s248 = scalar_select %p247, %s244, 1
      %s249 = smul.addr %s246, 2
      %s250 = sadd.s32 %s248, %s249
      %s251 = smul.addr %s250, 4
      %s252 = scalar_lea.vmem %s0, %s251
      %s253 = smul.u32 2, %s21
      %p254 = scmp.lt.s32.totalorder %s20, 1
      %s255 = scalar_select %p254, %s20, 1
      %p256 = scmp.lt.s32.totalorder %s21, 0
      %s257 = scalar_select %p256, %s21, 0
      %s258 = smul.addr %s257, 4
      %s259 = smul.addr %s255, 4
      %s260 = sadd.s32 %s258, %s259
      %s261 = smul.addr %s260, 8
      %s262 = scalar_lea.vmem %s5, %s261
      %v263 = vld [vmem:[%s252] sm:$0xff]
      %v264 = vld [vmem:[%s1] sm:$0xf]
      %266 = vset.pattern.permute.xlu0 0
      %267 = vperm.xlu0 %266, %v264
      %v268 = vpop.permute.xlu0 %267
      %v270 = vunpack.c.l.s4 839922192
      %v271 = vunpack.c.0.s8 %v270
      %v272 = vlaneseq
      %v273 = vshrl.u32 %v272, 7
      %v274 = vsub.s32 %v271, %v273
      %v275 = vrot.slane %v268, %v274
      %v277 = vmul.f32 %v263, %v275
      %v278 = vld [vmem:[%s2] sm:$0xf]
      %280 = vset.pattern.permute.xlu0 0
      %281 = vperm.xlu0 %280, %v278
      %v282 = vpop.permute.xlu0 %281
      %v284 = vunpack.c.l.s4 839922192
      %v285 = vunpack.c.0.s8 %v284
      %v286 = vlaneseq
      %v287 = vshrl.u32 %v286, 7
      %v288 = vsub.s32 %v285, %v287
      %v289 = vrot.slane %v282, %v288
      %v291 = vadd.f32 %v277, %v289
      %v292 = vmax.f32 %v291, 0.0
      %v293 = vld [vmem:[%s3] sm:$0xff]
      %v294 = vld [vmem:[%s3 + $0x8] sm:$0xff]
      %v295 = vld [vmem:[%s4] sm:$0xff]
      %v296 = vld [vmem:[%s4 + $0x8] sm:$0xff]
      %298 = vset.pattern.permute.xlu0 0
      %299 = vperm.xlu0 %298, %v295
      %v300 = vpop.permute.xlu0 %299
      %303 = vset.pattern.permute.xlu0 0
      %304 = vperm.xlu0 %303, %v296
      %v305 = vpop.permute.xlu0 %304
      %v308 = vcombine.high %v292, %v292
      %vm309 = vcmask 31744
      %v311 = vsel %vm309, %v293, 0
      %v314 = vsel %vm309, %v294, 0
      %vm316 = vcmask 1043456
      %v317 = vsel %vm316, %v292, 0
      %v319 = vsel %vm316, %v308, 0
      %321 = vmatprep.subr.mxu0 %v319
      %322 = vmatpush1.msra.mxu0 %v317
      %323 = vmatprep.subr.mxu0 0.0
      %324 = vmatpush1.msra.mxu0 0.0
      %325 = vmatprep.subr.mxu0 0.0
      %326 = vmatpush1.msra.mxu0 0.0
      %327 = vmatprep.subr.mxu0 0.0
      %328 = vmatpush1.msra.mxu0 0.0
      %329 = vmatprep.subr.mxu0 0.0
      %330 = vmatpush1.msra.mxu0 0.0
      %331 = vmatprep.subr.mxu0 0.0
      %332 = vmatpush1.msra.mxu0 0.0
      %333 = vmatprep.subr.mxu0 0.0
      %334 = vmatpush1.msra.mxu0 0.0
      %335 = vmatprep.subr.mxu0 0.0
      %336 = vmatpush1.msra.mxu0 0.0
      %337 = vmatprep.subr.mxu0 0.0
      %338 = vmatpush1.msra.mxu0 0.0
      %339 = vmatprep.subr.mxu0 0.0
      %340 = vmatpush1.msra.mxu0 0.0
      %341 = vmatprep.subr.mxu0 0.0
      %342 = vmatpush1.msra.mxu0 0.0
      %343 = vmatprep.subr.mxu0 0.0
      %344 = vmatpush1.msra.mxu0 0.0
      %345 = vmatprep.subr.mxu0 0.0
      %346 = vmatpush1.msra.mxu0 0.0
      %347 = vmatprep.subr.mxu0 0.0
      %348 = vmatpush1.msra.mxu0 0.0
      %349 = vmatprep.subr.mxu0 0.0
      %350 = vmatpush1.msra.mxu0 0.0
      %351 = vmatprep.subr.mxu0 0.0
      %352 = vmatpush1.msra.mxu0 0.0
      %353 = vmatprep.subr.mxu0 0.0
      %354 = vmatpush1.msra.mxu0 0.0
      %355 = vmatprep.subr.mxu0 0.0
      %356 = vmatpush1.msra.mxu0 0.0
      %357 = vmatprep.subr.mxu0 0.0
      %358 = vmatpush1.msra.mxu0 0.0
      %359 = vmatprep.subr.mxu0 0.0
      %360 = vmatpush1.msra.mxu0 0.0
      %361 = vmatprep.subr.mxu0 0.0
      %362 = vmatpush1.msra.mxu0 0.0
      %363 = vmatprep.subr.mxu0 0.0
      %364 = vmatpush1.msra.mxu0 0.0
      %365 = vmatprep.subr.mxu0 0.0
      %366 = vmatpush1.msra.mxu0 0.0
      %367 = vmatprep.subr.mxu0 0.0
      %368 = vmatpush1.msra.mxu0 0.0
      %369 = vmatprep.subr.mxu0 0.0
      %370 = vmatpush1.msra.mxu0 0.0
      %371 = vmatprep.subr.mxu0 0.0
      %372 = vmatpush1.msra.mxu0 0.0
      %373 = vmatprep.subr.mxu0 0.0
      %374 = vmatpush1.msra.mxu0 0.0
      %375 = vmatprep.subr.mxu0 0.0
      %376 = vmatpush1.msra.mxu0 0.0
      %377 = vmatprep.subr.mxu0 0.0
      %378 = vmatpush1.msra.mxu0 0.0
      %379 = vmatprep.subr.mxu0 0.0
      %380 = vmatpush1.msra.mxu0 0.0
      %381 = vmatprep.subr.mxu0 0.0
      %382 = vmatpush1.msra.mxu0 0.0
      %383 = vmatprep.subr.mxu0 0.0
      %384 = vmatpush1.msra.mxu0 0.0
      %385 = vmatprep.mubr.f32.mxu0 0.0
      %386 = vmatmul.mubr.f32.gmra.mrb[0].mxu0 %v311
      %v387 = vpop.f32.mrb[0].mxu0
      %v388 = vadd.f32 %v300, %v387
      %v389 = vpop.f32.mrb[0].mxu0
      %v390 = vadd.f32 %v300, %v389
      %391 = vmatprep.mubr.f32.mxu0 0.0
      %392 = vmatmul.mubr.f32.gmra.mrb[0].mxu0 %v314
      %v393 = vpop.f32.mrb[0].mxu0
      %v394 = vadd.f32 %v305, %v393
      %v395 = vpop.f32.mrb[0].mxu0
      %v396 = vadd.f32 %v305, %v395
      %397 = vdwg.mxu0
      %v398 = vadd.f32 %v388, %v390
      %399 = vadd.xlane.f32.xlu0 %v398
      %v400 = vpop.xlane.xlu0 %399
      %v401 = vadd.f32 %v394, %v396
      %402 = vadd.xlane.f32.xlu0 %v401
      %v403 = vpop.xlane.xlu0 %402
      %v404 = vmul.f32 %v388, %v388
      %v405 = vmul.f32 %v390, %v390
      %v406 = vmul.f32 %v394, %v394
      %v407 = vmul.f32 %v396, %v396
      %v408 = vadd.f32 %v404, %v405
      %409 = vadd.xlane.f32.xlu0 %v408
      %v410 = vpop.xlane.xlu0 %409
      %v411 = vadd.f32 %v406, %v407
      %412 = vadd.xlane.f32.xlu0 %v411
      %v413 = vpop.xlane.xlu0 %412
      %vm414 = vcmask 7168
      %415 = vst.msk [vmem:[%s262] sm:$0xff] %vm414, %v400
      %416 = vst.msk [vmem:[%s262 + $0x8] sm:$0xff] %vm414, %v403
      %417 = vst.msk [vmem:[%s262 + $0x10] sm:$0xff] %vm414, %v410
      %418 = vst.msk [vmem:[%s262 + $0x18] sm:$0xff] %vm414, %v413
      %p419 = scmp.lt.s32.totalorder %s20, 1
      %s420 = scalar_select %p419, %s20, 1
      %p421 = scmp.lt.s32.totalorder %s21, 0
      %s422 = scalar_select %p421, %s21, 0
      %s423 = smul.addr %s422, 4
      %s424 = smul.addr %s420, 4
      %s425 = sadd.s32 %s423, %s424
      %s426 = smul.addr %s425, 8
      %s427 = scalar_lea.vmem %s5, %s426
      // Predicated region
      $region41: #{bottleneck_forward.4} parent=39 // pred_check
        %p428 = pneg %p160
      $region42: #{bottleneck_forward.4} parent=39 // pred_check_branch
        %430 = sbr.rel (%p428) target = $region44
      $region43: #{bottleneck_forward.4} parent=39 // pred_region
        _
      $region44: #{bottleneck_forward.4} parent=39 // pred_fallthru
        _
    $region40: #{bottleneck_forward.4} parent=5 // pred_fallthru
      _
    %p431 = scmp.le.s32.totalorder 2, %s11
    // Predicated region
    $region45: #{bottleneck_forward.4} parent=5 // pred_check
      %p432 = pneg %p431
    $region46: #{bottleneck_forward.4} parent=5 // pred_check_branch
      %434 = sbr.rel (%p432) target = $region48
    $region47: #{bottleneck_forward.4} parent=5 // pred_region
      %s435 = ssub.s32 %s11, 2
      // Predicated region
      $region49: #{bottleneck_forward.4} parent=47 // pred_check
        %p436 = pneg %p166
      $region50: #{bottleneck_forward.4} parent=47 // pred_check_branch
        %438 = sbr.rel (%p436) target = $region52
      $region51: #{bottleneck_forward.4} parent=47 // pred_region
        %p439 = scmp.lt.s32.totalorder %s22, 1
        %s440 = scalar_select %p439, %s22, 1
        %p441 = scmp.lt.s32.totalorder %s23, 0
        %s442 = scalar_select %p441, %s23, 0
        %s443 = smul.addr %s442, 4
        %s444 = smul.addr %s440, 4
        %s445 = sadd.s32 %s443, %s444
        %s446 = smul.addr %s445, 8
        %s447 = scalar_lea.vmem %s5, %s446
      $region52: #{bottleneck_forward.4} parent=47 // pred_fallthru
        _
    $region48: #{bottleneck_forward.4} parent=5 // pred_fallthru
      _
  $region6: #{bottleneck_forward.4} parent=0 // loop_footer
    %s15 = sadd.s32 1, %s11
  $region7: #{bottleneck_forward.4} parent=0 // loop_footer_branch
    %10 = sbr.rel target = $region3
  $region8: #{bottleneck_forward.4} parent=0 // loop_exit
    _

// kernel: bottleneck_forward.5
$region0: #{bottleneck_forward.5}
  #allocation0 [shape = 'u32[]', space=smem, size = 0x4, offset = 0x4, fixed_abs, tag = 'smem constant byte address 0x4 - core index']
  #allocation1 [shape = 'u32[144,128]{1,0:T(1,128)}', space=vmem, size = 0x12000, scoped, tag = 'internal scratch']
  %s0 = inlined_call_operand.vmem [shape: f32[2,4,256], index: 0, kind: input, shape index: {}]
  %s1 = inlined_call_operand.vmem [shape: f32[4,1], index: 1, kind: input, shape index: {}]
  %s2 = inlined_call_operand.vmem [shape: f32[4,1], index: 2, kind: input, shape index: {}]
  %s3 = inlined_call_operand.vmem [shape: f32[16,4], index: 3, kind: input, shape index: {}]
  %s4 = inlined_call_operand.vmem [shape: f32[16,1], index: 4, kind: input, shape index: {}]
  %s5 = inlined_call_operand.vmem [shape: f32[16,1], index: 5, kind: input, shape index: {}]
  %s6 = inlined_call_operand.vmem [shape: f32[16,1], index: 6, kind: input, shape index: {}]
  %s7 = inlined_call_operand.vmem [shape: f32[4,144], index: 7, kind: input, shape index: {}]
  %s8 = inlined_call_operand.vmem [shape: f32[4,1], index: 8, kind: input, shape index: {}]
  %s9 = inlined_call_operand.vmem [shape: s32[2,256], index: 9, kind: input, shape index: {}]
  %s10 = inlined_call_operand.vmem [shape: f32[2,8,256], index: 10, kind: output, shape index: {}]
  %s11 = sld [smem:[#allocation0]]
  $region73: #{bottleneck_forward.5} parent=0
    _
  %s13 = ssub.s32 1, %s11
  %s14 = scalar_select 0, %s13, %s11
  loop: start=0, step=1, limit=4
  $region2: #{bottleneck_forward.5} parent=0 // loop_pre_header
    _
  $region3: #{bottleneck_forward.5} parent=0 // loop_header
    %s16 = sphi 0, %s20
    %p17 = scmp.ge.s32.totalorder %s16, 4
    %s26 = sphi 0, %s28
    %s29 = sphi 0, %s26
    %s30 = sphi 0, %s29
    %s46 = sphi 0, %s30
    %s50 = sphi 0, %s50
    %s52 = sphi 0, %s50
    %s53 = sphi 0, %s52
    %s67 = sphi 0, %s53
    %s71 = sphi 0, %s71
    %s73 = sphi 0, %s71
    %s74 = sphi 0, %s73
    %s88 = sphi 0, %s74
    %s92 = sphi 0, %s92
    %s94 = sphi 0, %s92
    %s95 = sphi 0, %s94
    %s109 = sphi 0, %s95
    %s113 = sphi 0, %s113
    %s115 = sphi 0, %s113
    %s116 = sphi 0, %s115
    %s130 = sphi 0, %s116
    %s134 = sphi 0, %s134
    %s136 = sphi 0, %s134
    %s137 = sphi 0, %s136
    %s151 = sphi 0, %s137
    %s155 = sphi 0, %s155
    %s157 = sphi 0, %s155
    %s158 = sphi 0, %s157
    %s172 = sphi 0, %s158
    %s176 = sphi 0, %s176
    %s178 = sphi 0, %s176
    %s179 = sphi 0, %s178
    %s193 = sphi 0, %s179
    %s197 = sphi 0, %s197
    %s199 = sphi 0, %s197
    %s200 = sphi 0, %s199
    %s214 = sphi 0, %s200
    %s218 = sphi 0, %s218
    %s220 = sphi 0, %s218
    %s221 = sphi 0, %s220
    %s235 = sphi 0, %s221
    %s241 = sphi 0, %s243
    %s244 = sphi 0, %s241
    %s245 = sphi 0, %s244
    %s261 = sphi 0, %s245
  $region4: #{bottleneck_forward.5} parent=0 // loop_header_branch
    %19 = sbr.rel (%p17) target = $region8
  $region5: #{bottleneck_forward.5} parent=0 // loop_body
    %s21 = ssub.s32 %s16, 1
    %s22 = ssub.s32 %s16, 2
    %s23 = sadd.s32 %s16, 1
    %s24 = ssub.s32 %s16, %s23
    %p25 = scmp.eq.s32.totalorder %s24, 0
    %s27 = sadd.s32 %s26, 1
    %s28 = scalar_select %p25, %s26, %s27
    %p31 = pneg %p25
    %p32 = scmp.eq.s32.totalorder %s16, 1
    %p33 = por %p31, %p32
    %p34 = scmp.ne.s32.totalorder %s26, %s29
    %p35 = scmp.eq.s32.totalorder %s16, 0
    %p36 = por %p34, %p35
    %p37 = scmp.ne.s32.totalorder %s26, %s29
    %p38 = scmp.eq.s32.totalorder %s21, 1
    %p39 = por %p37, %p38
    %p40 = scmp.ne.s32.totalorder %s29, %s30
    %p41 = scmp.eq.s32.totalorder %s21, 0
    %p42 = por %p40, %p41
    %p43 = scmp.ne.s32.totalorder %s29, %s30
    %p44 = scmp.eq.s32.totalorder %s22, 1
    %p45 = por %p43, %p44
    %p47 = scmp.ne.s32.totalorder %s30, %s46
    %p48 = scmp.eq.s32.totalorder %s22, 0
    %p49 = por %p47, %p48
    %s51 = sadd.s32 %s50, 1
    %p54 = scmp.eq.s32.totalorder %s16, 1
    %p55 = scmp.ne.s32.totalorder %s50, %s52
    %p56 = scmp.eq.s32.totalorder %s16, 0
    %p57 = por %p55, %p56
    %p58 = scmp.ne.s32.totalorder %s50, %s52
    %p59 = scmp.eq.s32.totalorder %s21, 1
    %p60 = por %p58, %p59
    %p61 = scmp.ne.s32.totalorder %s52, %s53
    %p62 = scmp.eq.s32.totalorder %s21, 0
    %p63 = por %p61, %p62
    %p64 = scmp.ne.s32.totalorder %s52, %s53
    %p65 = scmp.eq.s32.totalorder %s22, 1
    %p66 = por %p64, %p65
    %p68 = scmp.ne.s32.totalorder %s53, %s67
    %p69 = scmp.eq.s32.totalorder %s22, 0
    %p70 = por %p68, %p69
    %s72 = sadd.s32 %s71, 1
    %p75 = scmp.eq.s32.totalorder %s16, 1
    %p76 = scmp.ne.s32.totalorder %s71, %s73
    %p77 = scmp.eq.s32.totalorder %s16, 0
    %p78 = por %p76, %p77
    %p79 = scmp.ne.s32.totalorder %s71, %s73
    %p80 = scmp.eq.s32.totalorder %s21, 1
    %p81 = por %p79, %p80
    %p82 = scmp.ne.s32.totalorder %s73, %s74
    %p83 = scmp.eq.s32.totalorder %s21, 0
    %p84 = por %p82, %p83
    %p85 = scmp.ne.s32.totalorder %s73, %s74
    %p86 = scmp.eq.s32.totalorder %s22, 1
    %p87 = por %p85, %p86
    %p89 = scmp.ne.s32.totalorder %s74, %s88
    %p90 = scmp.eq.s32.totalorder %s22, 0
    %p91 = por %p89, %p90
    %s93 = sadd.s32 %s92, 1
    %p96 = scmp.eq.s32.totalorder %s16, 1
    %p97 = scmp.ne.s32.totalorder %s92, %s94
    %p98 = scmp.eq.s32.totalorder %s16, 0
    %p99 = por %p97, %p98
    %p100 = scmp.ne.s32.totalorder %s92, %s94
    %p101 = scmp.eq.s32.totalorder %s21, 1
    %p102 = por %p100, %p101
    %p103 = scmp.ne.s32.totalorder %s94, %s95
    %p104 = scmp.eq.s32.totalorder %s21, 0
    %p105 = por %p103, %p104
    %p106 = scmp.ne.s32.totalorder %s94, %s95
    %p107 = scmp.eq.s32.totalorder %s22, 1
    %p108 = por %p106, %p107
    %p110 = scmp.ne.s32.totalorder %s95, %s109
    %p111 = scmp.eq.s32.totalorder %s22, 0
    %p112 = por %p110, %p111
    %s114 = sadd.s32 %s113, 1
    %p117 = scmp.eq.s32.totalorder %s16, 1
    %p118 = scmp.ne.s32.totalorder %s113, %s115
    %p119 = scmp.eq.s32.totalorder %s16, 0
    %p120 = por %p118, %p119
    %p121 = scmp.ne.s32.totalorder %s113, %s115
    %p122 = scmp.eq.s32.totalorder %s21, 1
    %p123 = por %p121, %p122
    %p124 = scmp.ne.s32.totalorder %s115, %s116
    %p125 = scmp.eq.s32.totalorder %s21, 0
    %p126 = por %p124, %p125
    %p127 = scmp.ne.s32.totalorder %s115, %s116
    %p128 = scmp.eq.s32.totalorder %s22, 1
    %p129 = por %p127, %p128
    %p131 = scmp.ne.s32.totalorder %s116, %s130
    %p132 = scmp.eq.s32.totalorder %s22, 0
    %p133 = por %p131, %p132
    %s135 = sadd.s32 %s134, 1
    %p138 = scmp.eq.s32.totalorder %s16, 1
    %p139 = scmp.ne.s32.totalorder %s134, %s136
    %p140 = scmp.eq.s32.totalorder %s16, 0
    %p141 = por %p139, %p140
    %p142 = scmp.ne.s32.totalorder %s134, %s136
    %p143 = scmp.eq.s32.totalorder %s21, 1
    %p144 = por %p142, %p143
    %p145 = scmp.ne.s32.totalorder %s136, %s137
    %p146 = scmp.eq.s32.totalorder %s21, 0
    %p147 = por %p145, %p146
    %p148 = scmp.ne.s32.totalorder %s136, %s137
    %p149 = scmp.eq.s32.totalorder %s22, 1
    %p150 = por %p148, %p149
    %p152 = scmp.ne.s32.totalorder %s137, %s151
    %p153 = scmp.eq.s32.totalorder %s22, 0
    %p154 = por %p152, %p153
    %s156 = sadd.s32 %s155, 1
    %p159 = scmp.eq.s32.totalorder %s16, 1
    %p160 = scmp.ne.s32.totalorder %s155, %s157
    %p161 = scmp.eq.s32.totalorder %s16, 0
    %p162 = por %p160, %p161
    %p163 = scmp.ne.s32.totalorder %s155, %s157
    %p164 = scmp.eq.s32.totalorder %s21, 1
    %p165 = por %p163, %p164
    %p166 = scmp.ne.s32.totalorder %s157, %s158
    %p167 = scmp.eq.s32.totalorder %s21, 0
    %p168 = por %p166, %p167
    %p169 = scmp.ne.s32.totalorder %s157, %s158
    %p170 = scmp.eq.s32.totalorder %s22, 1
    %p171 = por %p169, %p170
    %p173 = scmp.ne.s32.totalorder %s158, %s172
    %p174 = scmp.eq.s32.totalorder %s22, 0
    %p175 = por %p173, %p174
    %s177 = sadd.s32 %s176, 1
    %p180 = scmp.eq.s32.totalorder %s16, 1
    %p181 = scmp.ne.s32.totalorder %s176, %s178
    %p182 = scmp.eq.s32.totalorder %s16, 0
    %p183 = por %p181, %p182
    %p184 = scmp.ne.s32.totalorder %s176, %s178
    %p185 = scmp.eq.s32.totalorder %s21, 1
    %p186 = por %p184, %p185
    %p187 = scmp.ne.s32.totalorder %s178, %s179
    %p188 = scmp.eq.s32.totalorder %s21, 0
    %p189 = por %p187, %p188
    %p190 = scmp.ne.s32.totalorder %s178, %s179
    %p191 = scmp.eq.s32.totalorder %s22, 1
    %p192 = por %p190, %p191
    %p194 = scmp.ne.s32.totalorder %s179, %s193
    %p195 = scmp.eq.s32.totalorder %s22, 0
    %p196 = por %p194, %p195
    %s198 = sadd.s32 %s197, 1
    %p201 = scmp.eq.s32.totalorder %s16, 1
    %p202 = scmp.ne.s32.totalorder %s197, %s199
    %p203 = scmp.eq.s32.totalorder %s16, 0
    %p204 = por %p202, %p203
    %p205 = scmp.ne.s32.totalorder %s197, %s199
    %p206 = scmp.eq.s32.totalorder %s21, 1
    %p207 = por %p205, %p206
    %p208 = scmp.ne.s32.totalorder %s199, %s200
    %p209 = scmp.eq.s32.totalorder %s21, 0
    %p210 = por %p208, %p209
    %p211 = scmp.ne.s32.totalorder %s199, %s200
    %p212 = scmp.eq.s32.totalorder %s22, 1
    %p213 = por %p211, %p212
    %p215 = scmp.ne.s32.totalorder %s200, %s214
    %p216 = scmp.eq.s32.totalorder %s22, 0
    %p217 = por %p215, %p216
    %s219 = sadd.s32 %s218, 1
    %p222 = scmp.eq.s32.totalorder %s16, 1
    %p223 = scmp.ne.s32.totalorder %s218, %s220
    %p224 = scmp.eq.s32.totalorder %s16, 0
    %p225 = por %p223, %p224
    %p226 = scmp.ne.s32.totalorder %s218, %s220
    %p227 = scmp.eq.s32.totalorder %s21, 1
    %p228 = por %p226, %p227
    %p229 = scmp.ne.s32.totalorder %s220, %s221
    %p230 = scmp.eq.s32.totalorder %s21, 0
    %p231 = por %p229, %p230
    %p232 = scmp.ne.s32.totalorder %s220, %s221
    %p233 = scmp.eq.s32.totalorder %s22, 1
    %p234 = por %p232, %p233
    %p236 = scmp.ne.s32.totalorder %s221, %s235
    %p237 = scmp.eq.s32.totalorder %s22, 0
    %p238 = por %p236, %p237
    %s239 = ssub.s32 %s16, %s23
    %p240 = scmp.eq.s32.totalorder %s239, 0
    %s242 = sadd.s32 %s241, 1
    %s243 = scalar_select %p240, %s241, %s242
    %p246 = pneg %p240
    %p247 = scmp.eq.s32.totalorder %s16, 1
    %p248 = por %p246, %p247
    %p249 = scmp.ne.s32.totalorder %s241, %s244
    %p250 = scmp.eq.s32.totalorder %s16, 0
    %p251 = por %p249, %p250
    %p252 = scmp.ne.s32.totalorder %s241, %s244
    %p253 = scmp.eq.s32.totalorder %s21, 1
    %p254 = por %p252, %p253
    %p255 = scmp.ne.s32.totalorder %s244, %s245
    %p256 = scmp.eq.s32.totalorder %s21, 0
    %p257 = por %p255, %p256
    %p258 = scmp.ne.s32.totalorder %s244, %s245
    %p259 = scmp.eq.s32.totalorder %s22, 1
    %p260 = por %p258, %p259
    %p262 = scmp.ne.s32.totalorder %s245, %s261
    %p263 = scmp.eq.s32.totalorder %s22, 0
    %p264 = por %p262, %p263
    %p265 = scmp.le.s32.totalorder 1, %s16
    %p266 = scmp.lt.s32.totalorder %s16, 3
    %p267 = pnand %p265, %p266
    %p268 = pneg %p267
    // Predicated region
    $region9: #{bottleneck_forward.5} parent=5 // pred_check
      _
    $region10: #{bottleneck_forward.5} parent=5 // pred_check_branch
      %270 = sbr.rel (%p267) target = $region12
    $region11: #{bottleneck_forward.5} parent=5 // pred_region
      %s271 = ssub.s32 %s16, 1
      // Predicated region
      $region13: #{bottleneck_forward.5} parent=11 // pred_check
        %p272 = pneg %p63
      $region14: #{bottleneck_forward.5} parent=11 // pred_check_branch
        %274 = sbr.rel (%p272) target = $region16
      $region15: #{bottleneck_forward.5} parent=11 // pred_region
        _
      $region16: #{bottleneck_forward.5} parent=11 // pred_fallthru
        _
      // Predicated region
      $region17: #{bottleneck_forward.5} parent=11 // pred_check
        %p275 = pneg %p84
      $region18: #{bottleneck_forward.5} parent=11 // pred_check_branch
        %277 = sbr.rel (%p275) target = $region20
      $region19: #{bottleneck_forward.5} parent=11 // pred_region
        _
      $region20: #{bottleneck_forward.5} parent=11 // pred_fallthru
        _
      // Predicated region
      $region21: #{bottleneck_forward.5} parent=11 // pred_check
        %p278 = pneg %p105
      $region22: #{bottleneck_forward.5} parent=11 // pred_check_branch
        %280 = sbr.rel (%p278) target = $region24
      $region23: #{bottleneck_forward.5} parent=11 // pred_region
        _
      $region24: #{bottleneck_forward.5} parent=11 // pred_fallthru
        _
      // Predicated region
      $region25: #{bottleneck_forward.5} parent=11 // pred_check
        %p281 = pneg %p126
      $region26: #{bottleneck_forward.5} parent=11 // pred_check_branch
        %283 = sbr.rel (%p281) target = $region28
      $region27: #{bottleneck_forward.5} parent=11 // pred_region
        _
      $region28: #{bottleneck_forward.5} parent=11 // pred_fallthru
        _
      // Predicated region
      $region29: #{bottleneck_forward.5} parent=11 // pred_check
        %p284 = pneg %p147
      $region30: #{bottleneck_forward.5} parent=11 // pred_check_branch
        %286 = sbr.rel (%p284) target = $region32
      $region31: #{bottleneck_forward.5} parent=11 // pred_region
        _
      $region32: #{bottleneck_forward.5} parent=11 // pred_fallthru
        _
      // Predicated region
      $region33: #{bottleneck_forward.5} parent=11 // pred_check
        %p287 = pneg %p168
      $region34: #{bottleneck_forward.5} parent=11 // pred_check_branch
        %289 = sbr.rel (%p287) target = $region36
      $region35: #{bottleneck_forward.5} parent=11 // pred_region
        _
      $region36: #{bottleneck_forward.5} parent=11 // pred_fallthru
        _
      // Predicated region
      $region37: #{bottleneck_forward.5} parent=11 // pred_check
        %p290 = pneg %p189
      $region38: #{bottleneck_forward.5} parent=11 // pred_check_branch
        %292 = sbr.rel (%p290) target = $region40
      $region39: #{bottleneck_forward.5} parent=11 // pred_region
        _
      $region40: #{bottleneck_forward.5} parent=11 // pred_fallthru
        _
      // Predicated region
      $region41: #{bottleneck_forward.5} parent=11 // pred_check
        %p293 = pneg %p210
      $region42: #{bottleneck_forward.5} parent=11 // pred_check_branch
        %295 = sbr.rel (%p293) target = $region44
      $region43: #{bottleneck_forward.5} parent=11 // pred_region
        _
      $region44: #{bottleneck_forward.5} parent=11 // pred_fallthru
        _
      // Predicated region
      $region45: #{bottleneck_forward.5} parent=11 // pred_check
        %p296 = pneg %p231
      $region46: #{bottleneck_forward.5} parent=11 // pred_check_branch
        %298 = sbr.rel (%p296) target = $region48
      $region47: #{bottleneck_forward.5} parent=11 // pred_region
        _
      $region48: #{bottleneck_forward.5} parent=11 // pred_fallthru
        _
    $region12: #{bottleneck_forward.5} parent=5 // pred_fallthru
      _
    %p299 = scmp.lt.s32.totalorder %s16, 2
    // Predicated region
    $region49: #{bottleneck_forward.5} parent=5 // pred_check
      %p300 = pneg %p299
    $region50: #{bottleneck_forward.5} parent=5 // pred_check_branch
      %302 = sbr.rel (%p300) target = $region52
    $region51: #{bottleneck_forward.5} parent=5 // pred_region
      // Predicated region
      $region53: #{bottleneck_forward.5} parent=51 // pred_check
        %p303 = pneg %p36
      $region54: #{bottleneck_forward.5} parent=51 // pred_check_branch
        %305 = sbr.rel (%p303) target = $region56
      $region55: #{bottleneck_forward.5} parent=51 // pred_region
        %p306 = scmp.lt.s32.totalorder %s16, 1
        %s307 = scalar_select %p306, %s16, 1
        %s308 = smul.addr %s307, 2
        %s309 = smul.addr %s308, 4
        %s310 = scalar_lea.vmem %s0, %s309
      $region56: #{bottleneck_forward.5} parent=51 // pred_fallthru
        _
    $region52: #{bottleneck_forward.5} parent=5 // pred_fallthru
      _
    %p311 = scmp.le.s32.totalorder 1, %s16
    %p312 = scmp.lt.s32.totalorder %s16, 3
    %p313 = pnand %p311, %p312
    %p314 = pneg %p313
    // Predicated region
    $region57: #{bottleneck_forward.5} parent=5 // pred_check
      _
    $region58: #{bottleneck_forward.5} parent=5 // pred_check_branch
      %316 = sbr.rel (%p313) target = $region60
    $region59: #{bottleneck_forward.5} parent=5 // pred_region
      %s317 = ssub.s32 %s16, 1
      %p318 = scmp.lt.s32.totalorder %s21, 1
      %s319 = scalar_select %p318, %s21, 1
      %s320 = smul.addr %s319, 2
      %s321 = smul.addr %s320, 4
      %s322 = scalar_lea.vmem %s0, %s321
      %p323 = pneg %p42
      %p324 = pneg %p39
      %p325 = pneg %p63
      %p326 = pneg %p60
      %p327 = pneg %p84
      %p328 = pneg %p81
      %p329 = pneg %p105
      %p330 = pneg %p102
      %p331 = pneg %p126
      %p332 = pneg %p123
      %p333 = pneg %p147
      %p334 = pneg %p144
      %p335 = pneg %p168
      %p336 = pneg %p165
      %p337 = pneg %p189
      %p338 = pneg %p186
      %p339 = pneg %p210
      %p340 = pneg %p207
      %p341 = pneg %p231
      %p342 = pneg %p228
      %p343 = pneg %p257
      %p344 = pneg %p254
      %p345 = scmp.lt.s32.totalorder %s21, 1
      %s346 = scalar_select %p345, %s21, 1
      %s347 = smul.addr %s346, 2
      %s348 = smul.addr %s347, 8
      %s349 = scalar_lea.vmem %s10, %s348
      %p350 = scmp.lt.s32.totalorder %s21, 1
      %s351 = scalar_select %p350, %s21, 1
      %s352 = smul.addr %s351, 2
      %s353 = smul.addr %s352, 4
      %s354 = scalar_lea.vmem %s0, %s353
      %p355 = scmp.lt.s32.totalorder %s21, 1
      %s356 = scalar_select %p355, %s21, 1
      %s357 = smul.addr %s356, 2
      %s358 = smul.addr %s357, 8
      %s359 = scalar_lea.vmem %s10, %s358
      %v360 = vld [vmem:[%s354] sm:$0xff]
      %v361 = vld [vmem:[%s1] sm:$0xf]
      %363 = vset.pattern.permute.xlu0 0
      %364 = vperm.xlu0 %363, %v361
      %v365 = vpop.permute.xlu0 %364
      %v367 = vunpack.c.l.s4 839922192
      %v368 = vunpack.c.0.s8 %v367
      %v369 = vlaneseq
      %v370 = vshrl.u32 %v369, 7
      %v371 = vsub.s32 %v368, %v370
      %v372 = vrot.slane %v365, %v371
      %v374 = vmul.f32 %v360, %v372
      %v375 = vld [vmem:[%s2] sm:$0xf]
      %377 = vset.pattern.permute.xlu0 0
      %378 = vperm.xlu0 %377, %v375
      %v379 = vpop.permute.xlu0 %378
      %v381 = vunpack.c.l.s4 839922192
      %v382 = vunpack.c.0.s8 %v381
      %v383 = vlaneseq
      %v384 = vshrl.u32 %v383, 7
      %v385 = vsub.s32 %v382, %v384
      %v386 = vrot.slane %v379, %v385
      %v388 = vadd.f32 %v374, %v386
      %v389 = vmax.f32 %v388, 0.0
      %v390 = vld [vmem:[%s3] sm:$0xff]
      %v391 = vld [vmem:[%s3 + $0x8] sm:$0xff]
      %v392 = vld [vmem:[%s4] sm:$0xff]
      %v393 = vld [vmem:[%s4 + $0x8] sm:$0xff]
      %395 = vset.pattern.permute.xlu0 0
      %396 = vperm.xlu0 %395, %v392
      %v397 = vpop.permute.xlu0 %396
      %400 = vset.pattern.permute.xlu0 0
      %401 = vperm.xlu0 %400, %v393
      %v402 = vpop.permute.xlu0 %401
      %v405 = vcombine.high %v389, %v389
      %vm406 = vcmask 31744
      %v408 = vsel %vm406, %v390, 0
      %v411 = vsel %vm406, %v391, 0
      %vm413 = vcmask 1043456
      %v414 = vsel %vm413, %v389, 0
      %v416 = vsel %vm413, %v405, 0
      %418 = vmatprep.subr.mxu0 %v416
      %419 = vmatpush1.msra.mxu0 %v414
      %420 = vmatprep.subr.mxu0 0.0
      %421 = vmatpush1.msra.mxu0 0.0
      %422 = vmatprep.subr.mxu0 0.0
      %423 = vmatpush1.msra.mxu0 0.0
      %424 = vmatprep.subr.mxu0 0.0
      %425 = vmatpush1.msra.mxu0 0.0
      %426 = vmatprep.subr.mxu0 0.0
      %427 = vmatpush1.msra.mxu0 0.0
      %428 = vmatprep.subr.mxu0 0.0
      %429 = vmatpush1.msra.mxu0 0.0
      %430 = vmatprep.subr.mxu0 0.0
      %431 = vmatpush1.msra.mxu0 0.0
      %432 = vmatprep.subr.mxu0 0.0
      %433 = vmatpush1.msra.mxu0 0.0
      %434 = vmatprep.subr.mxu0 0.0
      %435 = vmatpush1.msra.mxu0 0.0
      %436 = vmatprep.subr.mxu0 0.0
      %437 = vmatpush1.msra.mxu0 0.0
      %438 = vmatprep.subr.mxu0 0.0
      %439 = vmatpush1.msra.mxu0 0.0
      %440 = vmatprep.subr.mxu0 0.0
      %441 = vmatpush1.msra.mxu0 0.0
      %442 = vmatprep.subr.mxu0 0.0
      %443 = vmatpush1.msra.mxu0 0.0
      %444 = vmatprep.subr.mxu0 0.0
      %445 = vmatpush1.msra.mxu0 0.0
      %446 = vmatprep.subr.mxu0 0.0
      %447 = vmatpush1.msra.mxu0 0.0
      %448 = vmatprep.subr.mxu0 0.0
      %449 = vmatpush1.msra.mxu0 0.0
      %450 = vmatprep.subr.mxu0 0.0
      %451 = vmatpush1.msra.mxu0 0.0
      %452 = vmatprep.subr.mxu0 0.0
      %453 = vmatpush1.msra.mxu0 0.0
      %454 = vmatprep.subr.mxu0 0.0
      %455 = vmatpush1.msra.mxu0 0.0
      %456 = vmatprep.subr.mxu0 0.0
      %457 = vmatpush1.msra.mxu0 0.0
      %458 = vmatprep.subr.mxu0 0.0
      %459 = vmatpush1.msra.mxu0 0.0
      %460 = vmatprep.subr.mxu0 0.0
      %461 = vmatpush1.msra.mxu0 0.0
      %462 = vmatprep.subr.mxu0 0.0
      %463 = vmatpush1.msra.mxu0 0.0
      %464 = vmatprep.subr.mxu0 0.0
      %465 = vmatpush1.msra.mxu0 0.0
      %466 = vmatprep.subr.mxu0 0.0
      %467 = vmatpush1.msra.mxu0 0.0
      %468 = vmatprep.subr.mxu0 0.0
      %469 = vmatpush1.msra.mxu0 0.0
      %470 = vmatprep.subr.mxu0 0.0
      %471 = vmatpush1.msra.mxu0 0.0
      %472 = vmatprep.subr.mxu0 0.0
      %473 = vmatpush1.msra.mxu0 0.0
      %474 = vmatprep.subr.mxu0 0.0
      %475 = vmatpush1.msra.mxu0 0.0
      %476 = vmatprep.subr.mxu0 0.0
      %477 = vmatpush1.msra.mxu0 0.0
      %478 = vmatprep.subr.mxu0 0.0
      %479 = vmatpush1.msra.mxu0 0.0
      %480 = vmatprep.subr.mxu0 0.0
      %481 = vmatpush1.msra.mxu0 0.0
      %482 = vmatprep.mubr.f32.mxu0 0.0
      %483 = vmatmul.mubr.f32.gmra.mrb[0].mxu0 %v408
      %v484 = vpop.f32.mrb[0].mxu0
      %v485 = vadd.f32 %v397, %v484
      %v486 = vpop.f32.mrb[0].mxu0
      %v487 = vadd.f32 %v397, %v486
      %488 = vmatprep.mubr.f32.mxu0 0.0
      %489 = vmatmul.mubr.f32.gmra.mrb[0].mxu0 %v411
      %v490 = vpop.f32.mrb[0].mxu0
      %v491 = vadd.f32 %v402, %v490
      %v492 = vpop.f32.mrb[0].mxu0
      %v493 = vadd.f32 %v402, %v492
      %494 = vdwg.mxu0
      %v495 = vld [vmem:[%s5] sm:$0xff]
      %v496 = vld [vmem:[%s5 + $0x8] sm:$0xff]
      %498 = vset.pattern.permute.xlu0 0
      %499 = vperm.xlu0 %498, %v495
      %v500 = vpop.permute.xlu0 %499
      %503 = vset.pattern.permute.xlu0 0
      %504 = vperm.xlu0 %503, %v496
      %v505 = vpop.permute.xlu0 %504
      %v507 = vmul.f32 %v485, %v500
      %v508 = vmul.f32 %v487, %v500
      %v509 = vmul.f32 %v491, %v505
      %v510 = vmul.f32 %v493, %v505
      %v511 = vld [vmem:[%s6] sm:$0xff]
      %v512 = vld [vmem:[%s6 + $0x8] sm:$0xff]
      %514 = vset.pattern.permute.xlu0 0
      %515 = vperm.xlu0 %514, %v511
      %v516 = vpop.permute.xlu0 %515
      %519 = vset.pattern.permute.xlu0 0
      %520 = vperm.xlu0 %519, %v512
      %v521 = vpop.permute.xlu0 %520
      %v523 = vadd.f32 %v507, %v516
      %v524 = vadd.f32 %v508, %v516
      %v525 = vadd.f32 %v509, %v521
      %v526 = vadd.f32 %v510, %v521
      %v527 = vmax.f32 %v523, 0.0
      %v528 = vmax.f32 %v524, 0.0
      %v529 = vmax.f32 %v525, 0.0
      %v530 = vmax.f32 %v526, 0.0
      %v531 = vld [vmem:[%s9] sm:$0xf]
      %532 = vrot.lane.b32.xlu0 %v527, 17
      %v533 = vpop.permute.xlu0 %532
      %534 = vrot.lane.b32.xlu0 %v529, 17
      %v535 = vpop.permute.xlu0 %534
      %536 = vrot.lane.b32.xlu0 %v528, 17
      %v537 = vpop.permute.xlu0 %536
      %538 = vrot.lane.b32.xlu0 %v530, 17
      %v539 = vpop.permute.xlu0 %538
      %v540 = vlaneseq
      %v541 = vand.u32 %v540, 127
      %vm542 = vcmp.lt.s32.totalorder %v541, 17
      %v543 = vsel %vm542, %v533, %v537
      %v544 = vsel %vm542, %v535, %v539
      %v545 = vsel %vm542, %v537, %v533
      %v546 = vsel %vm542, %v539, %v535
      %vm547 = vcmp.ge.s32.totalorder %v531, 1
      %v548 = vsel %vm547, 1, 0
      %v549 = vrot.slane %v548, 7
      %v550 = vrot.slane %v549, 2
      %vm551 = vcmp.ne.s32.totalorder %v550, 0
      %vm552 = vmand %vm547, %vm551
      %v553 = vsel %vm552, 1, 0
      %v554 = vlaneseq
      %v555 = vshrl.u32 %v554, 7
      %v556 = vsub.s32 0, %v555
      %v557 = vrot.slane %v553, %v556
      %v558 = vlaneseq
      %v559 = vshrl.u32 %v558, 7
      %v560 = vsub.s32 2, %v559
      %v561 = vrot.slane %v553, %v560
      %v562 = vlaneseq
      %v563 = vshrl.u32 %v562, 7
      %v564 = vsub.s32 0, %v563
      %v565 = vrot.slane %v557, %v564
      %v566 = vlaneseq
      %v567 = vshrl.u32 %v566, 7
      %v568 = vsub.s32 0, %v567
      %v569 = vrot.slane %v561, %v568
      %vm570 = vcmp.eq.s32.totalorder %v565, 1
      %vm571 = vcmp.eq.s32.totalorder %v569, 1
      %v572 = vsel %vm570, %v545, 0.0
      %v573 = vsel %vm571, %v543, 0.0
      %v574 = vsel %vm570, %v546, 0.0
      %v575 = vsel %vm571, %v544, 0.0
      %576 = vrot.lane.b32.xlu0 %v527, 16
      %v577 = vpop.permute.xlu0 %576
      %578 = vrot.lane.b32.xlu0 %v529, 16
      %v579 = vpop.permute.xlu0 %578
      %580 = vrot.lane.b32.xlu0 %v528, 16
      %v581 = vpop.permute.xlu0 %580
      %582 = vrot.lane.b32.xlu0 %v530, 16
      %v583 = vpop.permute.xlu0 %582
      %vm584 = vcmp.lt.s32.totalorder %v541, 16
      %v585 = vsel %vm584, %v577, %v581
      %v586 = vsel %vm584, %v579, %v583
      %v587 = vsel %vm584, %v581, %v577
      %v588 = vsel %vm584, %v583, %v579
      %v589 = vlaneseq
      %v590 = vshrl.u32 %v589, 7
      %v591 = vsub.s32 0, %v590
      %v592 = vrot.slane %v548, %v591
      %v593 = vlaneseq
      %v594 = vshrl.u32 %v593, 7
      %v595 = vsub.s32 2, %v594
      %v596 = vrot.slane %v548, %v595
      %v597 = vlaneseq
      %v598 = vshrl.u32 %v597, 7
      %v599 = vsub.s32 0, %v598
      %v600 = vrot.slane %v592, %v599
      %v601 = vlaneseq
      %v602 = vshrl.u32 %v601, 7
      %v603 = vsub.s32 0, %v602
      %v604 = vrot.slane %v596, %v603
      %vm605 = vcmp.eq.s32.totalorder %v600, 1
      %vm606 = vcmp.eq.s32.totalorder %v604, 1
      %v607 = vsel %vm605, %v587, 0.0
      %v608 = vsel %vm606, %v585, 0.0
      %v609 = vsel %vm605, %v588, 0.0
      %v610 = vsel %vm606, %v586, 0.0
      %611 = vrot.lane.b32.xlu0 %v527, 15
      %v612 = vpop.permute.xlu0 %611
      %613 = vrot.lane.b32.xlu0 %v529, 15
      %v614 = vpop.permute.xlu0 %613
      %615 = vrot.lane.b32.xlu0 %v528, 15
      %v616 = vpop.permute.xlu0 %615
      %617 = vrot.lane.b32.xlu0 %v530, 15
      %v618 = vpop.permute.xlu0 %617
      %vm619 = vcmp.lt.s32.totalorder %v541, 15
      %v620 = vsel %vm619, %v612, %v616
      %v621 = vsel %vm619, %v614, %v618
      %v622 = vsel %vm619, %v616, %v612
      %v623 = vsel %vm619, %v618, %v614
      %vm624 = vcmp.le.s32.totalorder %v531, 14
      %v625 = vsel %vm624, 1, 0
      %v626 = vrot.slane %v625, 7
      %v627 = vrot.slane %v626, 2
      %vm628 = vcmp.ne.s32.totalorder %v627, 0
      %vm629 = vmand %vm547, %vm628
      %v630 = vsel %vm629, 1, 0
      %v631 = vlaneseq
      %v632 = vshrl.u32 %v631, 7
      %v633 = vsub.s32 0, %v632
      %v634 = vrot.slane %v630, %v633
      %v635 = vlaneseq
      %v636 = vshrl.u32 %v635, 7
      %v637 = vsub.s32 2, %v636
      %v638 = vrot.slane %v630, %v637
      %v639 = vlaneseq
      %v640 = vshrl.u32 %v639, 7
      %v641 = vsub.s32 0, %v640
      %v642 = vrot.slane %v634, %v641
      %v643 = vlaneseq
      %v644 = vshrl.u32 %v643, 7
      %v645 = vsub.s32 0, %v644
      %v646 = vrot.slane %v638, %v645
      %vm647 = vcmp.eq.s32.totalorder %v642, 1
      %vm648 = vcmp.eq.s32.totalorder %v646, 1
      %v649 = vsel %vm647, %v622, 0.0
      %v650 = vsel %vm648, %v620, 0.0
      %v651 = vsel %vm647, %v623, 0.0
      %v652 = vsel %vm648, %v621, 0.0
      %653 = vrot.lane.b32.xlu0 %v527, 1
      %v654 = vpop.permute.xlu0 %653
      %655 = vrot.lane.b32.xlu0 %v529, 1
      %v656 = vpop.permute.xlu0 %655
      %657 = vrot.lane.b32.xlu0 %v528, 1
      %v658 = vpop.permute.xlu0 %657
      %659 = vrot.lane.b32.xlu0 %v530, 1
      %v660 = vpop.permute.xlu0 %659
      %vm661 = vcmp.lt.s32.totalorder %v541, 1
      %v662 = vsel %vm661, %v654, %v658
      %v663 = vsel %vm661, %v656, %v660
      %v664 = vsel %vm661, %v658, %v654
      %v665 = vsel %vm661, %v660, %v656
      %v666 = vlaneseq
      %v667 = vshrl.u32 %v666, 7
      %v668 = vsub.s32 1, %v667
      %v669 = vrot.slane %v548, %v668
      %v670 = vlaneseq
      %v671 = vshrl.u32 %v670, 7
      %v672 = vsub.s32 3, %v671
      %v673 = vrot.slane %v548, %v672
      %v674 = vlaneseq
      %v675 = vshrl.u32 %v674, 7
      %v676 = vsub.s32 1, %v675
      %v677 = vrot.slane %v669, %v676
      %v678 = vlaneseq
      %v679 = vshrl.u32 %v678, 7
      %v680 = vsub.s32 1, %v679
      %v681 = vrot.slane %v673, %v680
      %vm682 = vcmp.eq.s32.totalorder %v677, 1
      %vm683 = vcmp.eq.s32.totalorder %v681, 1
      %v684 = vsel %vm682, %v664, 0.0
      %v685 = vsel %vm683, %v662, 0.0
      %v686 = vsel %vm682, %v665, 0.0
      %v687 = vsel %vm683, %v663, 0.0
      %688 = vrot.lane.b32.xlu0 %v527, 127
      %v689 = vpop.permute.xlu0 %688
      %690 = vrot.lane.b32.xlu0 %v529, 127
      %v691 = vpop.permute.xlu0 %690
      %692 = vrot.lane.b32.xlu0 %v528, 127
      %v693 = vpop.permute.xlu0 %692
      %694 = vrot.lane.b32.xlu0 %v530, 127
      %v695 = vpop.permute.xlu0 %694
      %vm696 = vcmp.lt.s32.totalorder %v541, 127
      %v697 = vsel %vm696, %v689, %v693
      %v698 = vsel %vm696, %v691, %v695
      %v699 = vsel %vm696, %v693, %v689
      %v700 = vsel %vm696, %v695, %v691
      %v701 = vlaneseq
      %v702 = vshrl.u32 %v701, 7
      %v703 = vsub.s32 1, %v702
      %v704 = vrot.slane %v625, %v703
      %v705 = vlaneseq
      %v706 = vshrl.u32 %v705, 7
      %v707 = vsub.s32 3, %v706
      %v708 = vrot.slane %v625, %v707
      %v709 = vlaneseq
      %v710 = vshrl.u32 %v709, 7
      %v711 = vsub.s32 1, %v710
      %v712 = vrot.slane %v704, %v711
      %v713 = vlaneseq
      %v714 = vshrl.u32 %v713, 7
      %v715 = vsub.s32 1, %v714
      %v716 = vrot.slane %v708, %v715
      %vm717 = vcmp.eq.s32.totalorder %v712, 1
      %vm718 = vcmp.eq.s32.totalorder %v716, 1
      %v719 = vsel %vm717, %v697, 0.0
      %v720 = vsel %vm718, %v699, 0.0
      %v721 = vsel %vm717, %v698, 0.0
      %v722 = vsel %vm718, %v700, 0.0
      %723 = vrot.lane.b32.xlu0 %v527, 113
      %v724 = vpop.permute.xlu0 %723
      %725 = vrot.lane.b32.xlu0 %v529, 113
      %v726 = vpop.permute.xlu0 %725
      %727 = vrot.lane.b32.xlu0 %v528, 113
      %v728 = vpop.permute.xlu0 %727
      %729 = vrot.lane.b32.xlu0 %v530, 113
      %v730 = vpop.permute.xlu0 %729
      %vm731 = vcmp.lt.s32.totalorder %v541, 113
      %v732 = vsel %vm731, %v724, %v728
      %v733 = vsel %vm731, %v726, %v730
      %v734 = vsel %vm731, %v728, %v724
      %v735 = vsel %vm731, %v730, %v726
      %vm736 = vmand %vm624, %vm551
      %v737 = vsel %vm736, 1, 0
      %v738 = vlaneseq
      %v739 = vshrl.u32 %v738, 7
      %v740 = vsub.s32 0, %v739
      %v741 = vrot.slane %v737, %v740
      %v742 = vlaneseq
      %v743 = vshrl.u32 %v742, 7
      %v744 = vsub.s32 2, %v743
      %v745 = vrot.slane %v737, %v744
      %v746 = vlaneseq
      %v747 = vshrl.u32 %v746, 7
      %v748 = vsub.s32 0, %v747
      %v749 = vrot.slane %v741, %v748
      %v750 = vlaneseq
      %v751 = vshrl.u32 %v750, 7
      %v752 = vsub.s32 0, %v751
      %v753 = vrot.slane %v745, %v752
      %vm754 = vcmp.eq.s32.totalorder %v749, 1
      %vm755 = vcmp.eq.s32.totalorder %v753, 1
      %v756 = vsel %vm754, %v732, 0.0
      %v757 = vsel %vm755, %v734, 0.0
      %v758 = vsel %vm754, %v733, 0.0
      %v759 = vsel %vm755, %v735, 0.0
      %760 = vrot.lane.b32.xlu0 %v527, 112
      %v761 = vpop.permute.xlu0 %760
      %762 = vrot.lane.b32.xlu0 %v529, 112
      %v763 = vpop.permute.xlu0 %762
      %764 = vrot.lane.b32.xlu0 %v528, 112
      %v765 = vpop.permute.xlu0 %764
      %766 = vrot.lane.b32.xlu0 %v530, 112
      %v767 = vpop.permute.xlu0 %766
      %vm768 = vcmp.lt.s32.totalorder %v541, 112
      %v769 = vsel %vm768, %v761, %v765
      %v770 = vsel %vm768, %v763, %v767
      %v771 = vsel %vm768, %v765, %v761
      %v772 = vsel %vm768, %v767, %v763
      %v773 = vlaneseq
      %v774 = vshrl.u32 %v773, 7
      %v775 = vsub.s32 0, %v774
      %v776 = vrot.slane %v625, %v775
      %v777 = vlaneseq
      %v778 = vshrl.u32 %v777, 7
      %v779 = vsub.s32 2, %v778
      %v780 = vrot.slane %v625, %v779
      %v781 = vlaneseq
      %v782 = vshrl.u32 %v781, 7
      %v783 = vsub.s32 0, %v782
      %v784 = vrot.slane %v776, %v783
      %v785 = vlaneseq
      %v786 = vshrl.u32 %v785, 7
      %v787 = vsub.s32 0, %v786
      %v788 = vrot.slane %v780, %v787
      %vm789 = vcmp.eq.s32.totalorder %v784, 1
      %vm790 = vcmp.eq.s32.totalorder %v788, 1
      %v791 = vsel %vm789, %v769, 0.0
      %v792 = vsel %vm790, %v771, 0.0
      %v793 = vsel %vm789, %v770, 0.0
      %v794 = vsel %vm790, %v772, 0.0
      %795 = vrot.lane.b32.xlu0 %v527, 111
      %v796 = vpop.permute.xlu0 %795
      %797 = vrot.lane.b32.xlu0 %v529, 111
      %v798 = vpop.permute.xlu0 %797
      %799 = vrot.lane.b32.xlu0 %v528, 111
      %v800 = vpop.permute.xlu0 %799
      %801 = vrot.lane.b32.xlu0 %v530, 111
      %v802 = vpop.permute.xlu0 %801
      %vm803 = vcmp.lt.s32.totalorder %v541, 111
      %v804 = vsel %vm803, %v796, %v800
      %v805 = vsel %vm803, %v798, %v802
      %v806 = vsel %vm803, %v800, %v796
      %v807 = vsel %vm803, %v802, %v798
      %vm808 = vmand %vm624, %vm628
      %v809 = vsel %vm808, 1, 0
      %v810 = vlaneseq
      %v811 = vshrl.u32 %v810, 7
      %v812 = vsub.s32 0, %v811
      %v813 = vrot.slane %v809, %v812
      %v814 = vlaneseq
      %v815 = vshrl.u32 %v814, 7
      %v816 = vsub.s32 2, %v815
      %v817 = vrot.slane %v809, %v816
      %v818 = vlaneseq
      %v819 = vshrl.u32 %v818, 7
      %v820 = vsub.s32 0, %v819
      %v821 = vrot.slane %v813, %v820
      %v822 = vlaneseq
      %v823 = vshrl.u32 %v822, 7
      %v824 = vsub.s32 0, %v823
      %v825 = vrot.slane %v817, %v824
      %vm826 = vcmp.eq.s32.totalorder %v821, 1
      %vm827 = vcmp.eq.s32.totalorder %v825, 1
      %v828 = vsel %vm826, %v804, 0.0
      %v829 = vsel %vm827, %v806, 0.0
      %v830 = vsel %vm826, %v805, 0.0
      %v831 = vsel %vm827, %v807, 0.0
      %v832 = vld [vmem:[%s7] sm:$0xff]
      %v833 = vld [vmem:[%s8] sm:$0xf]
      %835 = vset.pattern.permute.xlu0 0
      %836 = vperm.xlu0 %835, %v833
      %v837 = vpop.permute.xlu0 %836
      %v840 = vcombine.high %v832, %v832
      %vm841 = vcmask 130048
      %v842 = vsel %vm841, %v840, 0
      %844 = vmatprep.subr.mxu0 %v573
      %845 = vmatpush1.msra.mxu0 %v572
      %846 = vmatprep.subr.mxu0 %v575
      %847 = vmatpush1.msra.mxu0 %v574
      %848 = vmatprep.subr.mxu0 %v608
      %849 = vmatpush1.msra.mxu0 %v607
      %850 = vmatprep.subr.mxu0 %v610
      %851 = vmatpush1.msra.mxu0 %v609
      %852 = vmatprep.subr.mxu0 %v650
      %853 = vmatpush1.msra.mxu0 %v649
      %854 = vmatprep.subr.mxu0 %v652
      %855 = vmatpush1.msra.mxu0 %v651
      %856 = vmatprep.subr.mxu0 %v685
      %857 = vmatpush1.msra.mxu0 %v684
      %858 = vmatprep.subr.mxu0 %v687
      %859 = vmatpush1.msra.mxu0 %v686
      %860 = vmatprep.subr.mxu0 %v528
      %861 = vmatpush1.msra.mxu0 %v527
      %862 = vmatprep.subr.mxu0 %v530
      %863 = vmatpush1.msra.mxu0 %v529
      %864 = vmatprep.subr.mxu0 %v720
      %865 = vmatpush1.msra.mxu0 %v719
      %866 = vmatprep.subr.mxu0 %v722
      %867 = vmatpush1.msra.mxu0 %v721
      %868 = vmatprep.subr.mxu0 %v757
      %869 = vmatpush1.msra.mxu0 %v756
      %870 = vmatprep.subr.mxu0 %v759
      %871 = vmatpush1.msra.mxu0 %v758
      %872 = vmatprep.subr.mxu0 %v792
      %873 = vmatpush1.msra.mxu0 %v791
      %874 = vmatprep.subr.mxu0 %v794
      %875 = vmatpush1.msra.mxu0 %v793
      %876 = vmatprep.subr.mxu0 %v829
      %877 = vmatpush1.msra.mxu0 %v828
      %878 = vmatprep.subr.mxu0 %v831
      %879 = vmatpush1.msra.mxu0 %v830
      %880 = vmatprep.subr.mxu0 0.0
      %881 = vmatpush1.msra.mxu0 0.0
      %882 = vmatprep.subr.mxu0 0.0
      %883 = vmatpush1.msra.mxu0 0.0
      %884 = vmatprep.subr.mxu0 0.0
      %885 = vmatpush1.msra.mxu0 0.0
      %886 = vmatprep.subr.mxu0 0.0
      %887 = vmatpush1.msra.mxu0 0.0
      %888 = vmatprep.subr.mxu0 0.0
      %889 = vmatpush1.msra.mxu0 0.0
      %890 = vmatprep.subr.mxu0 0.0
      %891 = vmatpush1.msra.mxu0 0.0
      %892 = vmatprep.subr.mxu0 0.0
      %893 = vmatpush1.msra.mxu0 0.0
      %894 = vmatprep.subr.mxu0 0.0
      %895 = vmatpush1.msra.mxu0 0.0
      %896 = vmatprep.subr.mxu0 0.0
      %897 = vmatpush1.msra.mxu0 0.0
      %898 = vmatprep.subr.mxu0 0.0
      %899 = vmatpush1.msra.mxu0 0.0
      %900 = vmatprep.subr.mxu0 0.0
      %901 = vmatpush1.msra.mxu0 0.0
      %902 = vmatprep.subr.mxu0 0.0
      %903 = vmatpush1.msra.mxu0 0.0
      %904 = vmatprep.subr.mxu0 0.0
      %905 = vmatpush1.msra.mxu0 0.0
      %906 = vmatprep.subr.mxu0 0.0
      %907 = vmatpush1.msra.mxu0 0.0
      %908 = vmatprep.mubr.f32.mxu0 %v842
      %909 = vmatmul.mubr.f32.gmra.mrb[0].mxu0 %v832
      %v910 = vpop.f32.mrb[0].mxu0
      %v911 = vadd.f32 %v837, %v910
      %v912 = vpop.f32.mrb[0].mxu0
      %v913 = vadd.f32 %v837, %v912
      %914 = vdwg.mxu0
      %v916 = vcombine.high %v360, %v360
      %v920 = vrot.slane %v911, 4
      %v921 = vrot.slane %v913, 4
      %v924 = vsel %vm413, %v360, %v920
      %v925 = vsel %vm413, %v916, %v921
      %926 = vst [vmem:[%s359] sm:$0xff] %v924
      %927 = vst [vmem:[%s359 + $0x8] sm:$0xff] %v925
      %p928 = scmp.lt.s32.totalorder %s21, 1
      %s929 = scalar_select %p928, %s21, 1
      %s930 = smul.addr %s929, 2
      %s931 = smul.addr %s930, 8
      %s932 = scalar_lea.vmem %s10, %s931
      // Predicated region
      $region61: #{bottleneck_forward.5} parent=59 // pred_check
        %p933 = pneg %p254
      $region62: #{bottleneck_forward.5} parent=59 // pred_check_branch
        %935 = sbr.rel (%p933) target = $region64
      $region63: #{bottleneck_forward.5} parent=59 // pred_region
        _
      $region64: #{bottleneck_forward.5} parent=59 // pred_fallthru
        _
    $region60: #{bottleneck_forward.5} parent=5 // pred_fallthru
      _
    %p936 = scmp.le.s32.totalorder 2, %s16
    // Predicated region
    $region65: #{bottleneck_forward.5} parent=5 // pred_check
      %p937 = pneg %p936
    $region66: #{bottleneck_forward.5} parent=5 // pred_check_branch
      %939 = sbr.rel (%p937) target = $region68
    $region67: #{bottleneck_forward.5} parent=5 // pred_region
      %s940 = ssub.s32 %s16, 2
      // Predicated region
      $region69: #{bottleneck_forward.5} parent=67 // pred_check
        %p941 = pneg %p260
      $region70: #{bottleneck_forward.5} parent=67 // pred_check_branch
        %943 = sbr.rel (%p941) target = $region72
      $region71: #{bottleneck_forward.5} parent=67 // pred_region
        %p944 = scmp.lt.s32.totalorder %s22, 1
        %s945 = scalar_select %p944, %s22, 1
        %s946 = smul.addr %s945, 2
        %s947 = smul.addr %s946, 8
        %s948 = scalar_lea.vmem %s10, %s947
      $region72: #{bottleneck_forward.5} parent=67 // pred_fallthru
        _
    $region68: #{bottleneck_forward.5} parent=5 // pred_fallthru
      _
  $region6: #{bottleneck_forward.5} parent=0 // loop_footer
    %s20 = sadd.s32 1, %s16
  $region7: #{bottleneck_forward.5} parent=0 // loop_footer_branch
    %15 = sbr.rel target = $region3
  $region8: #{bottleneck_forward.5} parent=0 // loop_exit
    _

</llo_original>
